<compile_context>
chip_gen: v6e
topology: v6e:2x2x1
jax: 0.10.0
libtpu: 0.0.40
codegen_flags: <defaults>
</compile_context>

<pallas_src>
import functools
import math

import jax
import jax.numpy as jnp
from jax.experimental import pallas as pl
from jax.experimental.pallas import tpu as pltpu

HIDDEN = 768            # fixed by nn.Linear(768, num_labels, False)
LANE = 128              # pad num_labels up to a multiple of the lane width
DEFAULT_TILE_B = 2048   # multiple of 16 (bf16 sublane tile); ~11 MiB VMEM double-buffered


def _round_up(x, m):
    return (x + m - 1) // m * m


def _cdiv(a, b):
    return -(-a // b)


def _has_bf16_eup():
    """bf16 transcendentals are only profitable/supported on v6e / v7x EUPs."""
    try:
        kind = jax.devices()[0].device_kind.lower()
    except Exception:
        return False
    return ("v6" in kind) or ("v7" in kind) or ("7x" in kind)


# ----------------------------------------------------------------------------
# Pallas kernels
# ----------------------------------------------------------------------------
def _pooled_bf16(cls_ref, pw_ref, pb_ref, use_bf16_tanh):
    """Fused pooler: tanh(cls @ W_pool + b) -> bf16 for the typing matmul."""
    pre = jnp.dot(cls_ref[...], pw_ref[...],
                  preferred_element_type=jnp.float32) + pb_ref[...]   # [TB, H] f32
    if use_bf16_tanh:
        # v6e/v7x: bf16 EUP — halves tanh time; result feeds a bf16 matmul anyway.
        return jnp.tanh(pre.astype(jnp.bfloat16))
    # v5e (or unknown): no bf16 EUP/VPU — keep tanh in f32, cast afterwards.
    return jnp.tanh(pre).astype(jnp.bfloat16)


def _logits_kernel(cls_ref, pw_ref, pb_ref, tw_ref, logits_ref, *, use_bf16_tanh):
    """pooler(tanh) + dropout(eval=identity) + typing linear (no bias)."""
    # TODO(synk): training-mode dropout(0.1) (pltpu PRNG mask + 1/0.9 scale) not implemented.
    pooled = _pooled_bf16(cls_ref, pw_ref, pb_ref, use_bf16_tanh)
    logits = jnp.dot(pooled, tw_ref[...],
                     preferred_element_type=jnp.float32)              # [TB, L_pad] f32
    logits_ref[...] = logits.astype(logits_ref.dtype)                 # bf16 store (lane-dense)


def _loss_kernel(cls_ref, pw_ref, pb_ref, tw_ref, labels_ref, partial_ref,
                 *, batch, num_labels, tile_b, use_bf16_tanh):
    """Same head + numerically stable BCEWithLogits, per-tile partial sums.

    Each grid step writes its own (1, 8, L_pad) partial-sum block (fully
    parallel grid axis); the host-side wrapper does the final tiny sum/mean.
    """
    i = pl.program_id(0)

    # TODO(synk): training-mode dropout(0.1) not implemented (eval identity).
    pooled = _pooled_bf16(cls_ref, pw_ref, pb_ref, use_bf16_tanh)
    z = jnp.dot(pooled, tw_ref[...], preferred_element_type=jnp.float32)  # [TB, L_pad] f32
    y = labels_ref[...].astype(jnp.float32)                               # bf16 0/1 -> f32

    # Stable BCEWithLogits: max(z,0) - z*y + log1p(exp(-|z|))   (all f32)
    per = jnp.maximum(z, 0.0) - z * y + jnp.log1p(jnp.exp(-jnp.abs(z)))

    # Mask batch-row / label-column padding so it doesn't pollute the mean.
    row = i * tile_b + jax.lax.broadcasted_iota(jnp.int32, per.shape, 0)
    col = jax.lax.broadcasted_iota(jnp.int32, per.shape, 1)
    per = jnp.where((row < batch) & (col < num_labels), per, 0.0)

    # Sublane-group partial reduce: (TB, L_pad) -> (1, 8, L_pad).  Pure VPU
    # adds over vregs (no cross-lane XLU reduce); output block is dense.
    partial_ref[...] = jnp.sum(per.reshape(1, -1, 8, per.shape[-1]), axis=1)


# ----------------------------------------------------------------------------
# Wrappers around pallas_call
# ----------------------------------------------------------------------------
def _prep_operands(cls_out, pooler_w, pooler_b, typing_w, tile_b):
    B, H = cls_out.shape
    L, H2 = typing_w.shape
    assert H == HIDDEN and H2 == HIDDEN

    L_pad = _round_up(L, LANE)
    # Balanced batch tiling: at most 15 padded rows (vs. up to tile_b-1 before).
    nb = _cdiv(B, tile_b)
    tb = _round_up(_cdiv(B, nb), 16)          # multiple of 16 (bf16 sublane tile)
    B_pad = nb * tb

    cls_bf = cls_out if cls_out.dtype == jnp.bfloat16 else cls_out.astype(jnp.bfloat16)
    if B_pad != B:
        cls_bf = jnp.pad(cls_bf, ((0, B_pad - B), (0, 0)))
    pw_bf = pooler_w.astype(jnp.bfloat16)                              # [H, H]
    pb_f32 = pooler_b.reshape(1, HIDDEN).astype(jnp.float32)           # [1, H]
    # Pre-transpose + lane-pad typing weight: [L, H] -> [H, L_pad].
    tw_bf = jnp.pad(typing_w.T.astype(jnp.bfloat16), ((0, 0), (0, L_pad - L)))
    return cls_bf, pw_bf, pb_f32, tw_bf, (B, L, L_pad, tb, B_pad, nb)


def _common_in_specs(tb, L_pad):
    return [
        pl.BlockSpec((tb, HIDDEN), lambda i: (i, 0)),        # cls (bf16)
        pl.BlockSpec((HIDDEN, HIDDEN), lambda i: (0, 0)),    # pooler weight (resident)
        pl.BlockSpec((1, HIDDEN), lambda i: (0, 0)),         # pooler bias (f32)
        pl.BlockSpec((HIDDEN, L_pad), lambda i: (0, 0)),     # typing weight^T (resident)
    ]


def typing_logits(cls_out, pooler_w, pooler_b, typing_w, *, tile_b=DEFAULT_TILE_B):
    """Serving path: returns logits [B, num_labels] (no labels DMA, no BCE work)."""
    cls_bf, pw_bf, pb_f32, tw_bf, (B, L, L_pad, tb, B_pad, nb) = _prep_operands(
        cls_out, pooler_w, pooler_b, typing_w, tile_b)

    kernel = functools.partial(_logits_kernel, use_bf16_tanh=_has_bf16_eup())
    logits = pl.pallas_call(
        kernel,
        grid=(nb,),
        in_specs=_common_in_specs(tb, L_pad),
        out_specs=pl.BlockSpec((tb, L_pad), lambda i: (i, 0)),
        out_shape=jax.ShapeDtypeStruct((B_pad, L_pad), jnp.bfloat16),
        compiler_params=pltpu.CompilerParams(dimension_semantics=("parallel",)),
    )(cls_bf, pw_bf, pb_f32, tw_bf)
    return logits[:B, :L].astype(jnp.float32)


def typing_bce_loss(cls_out, pooler_w, pooler_b, typing_w, labels,
                    *, tile_b=DEFAULT_TILE_B):
    """Training path: returns scalar BCEWithLogitsLoss (mean over B * num_labels)."""
    cls_bf, pw_bf, pb_f32, tw_bf, (B, L, L_pad, tb, B_pad, nb) = _prep_operands(
        cls_out, pooler_w, pooler_b, typing_w, tile_b)
    # bf16 labels are exact for hard 0/1 multi-hot labels (entity-typing targets).
    labels_bf = labels.astype(jnp.bfloat16)
    if B_pad != B or L_pad != L:
        labels_bf = jnp.pad(labels_bf, ((0, B_pad - B), (0, L_pad - L)))

    kernel = functools.partial(_loss_kernel, batch=B, num_labels=L, tile_b=tb,
                               use_bf16_tanh=_has_bf16_eup())
    partials = pl.pallas_call(
        kernel,
        grid=(nb,),
        in_specs=_common_in_specs(tb, L_pad)
        + [pl.BlockSpec((tb, L_pad), lambda i: (i, 0))],              # labels (bf16)
        out_specs=pl.BlockSpec((1, 8, L_pad), lambda i: (i, 0, 0)),   # per-tile partials
        out_shape=jax.ShapeDtypeStruct((nb, 8, L_pad), jnp.float32),
        compiler_params=pltpu.CompilerParams(dimension_semantics=("parallel",)),
    )(cls_bf, pw_bf, pb_f32, tw_bf, labels_bf)
    # Tiny final reduction outside the kernel; true global mean over B * num_labels.
    return jnp.sum(partials) / jnp.float32(B * L)


# ----------------------------------------------------------------------------
# Deterministic stand-in for the external `self.bert` (ERNIE-style) encoder.
# ----------------------------------------------------------------------------
# TODO(synk): the full injected ERNIE/BERT encoder stack (self.bert) is an
# external module; only its output interface is reproduced here (embedding
# lookups + masked mean + entity projection).  Its final pooler (dense + tanh)
# is fused into the Pallas kernels above so pooled_output stays in VMEM.
def synthetic_bert_cls(params, input_ids, token_type_ids, attention_mask,
                       input_ent, ent_mask):
    word = params["word_emb"][input_ids]                       # [B, S, H]
    tok = params["type_emb"][token_type_ids]                   # [B, S, H]
    h = word + tok
    m = attention_mask[..., None].astype(h.dtype)              # [B, S, 1]
    seq_feat = (h * m).sum(axis=1) / jnp.maximum(m.sum(axis=1), 1.0)     # [B, H]

    em = ent_mask[..., None].astype(input_ent.dtype)           # [B, S, 1]
    ent_feat = (input_ent * em).sum(axis=1) @ params["ent_proj"]          # [B, H]
    # Emit bf16 directly: saves the wrapper-side pad/cast pass over cls_out
    # (the Pallas kernel feeds the MXU in bf16 anyway).
    return (seq_feat + 0.1 * ent_feat).astype(jnp.bfloat16)    # pre-pooler feature


# ----------------------------------------------------------------------------
# Module wrapper mirroring BertForEntityTyping.forward
# ----------------------------------------------------------------------------
class BertForEntityTypingPallas:
    def __init__(self, bert_params, num_labels=2, key=None):
        self.bert_params = bert_params
        self.num_labels = num_labels
        # torch.nn.init.xavier_uniform_ on weight of shape [num_labels, 768]
        bound = math.sqrt(6.0 / (HIDDEN + num_labels))
        key = jax.random.PRNGKey(0) if key is None else key
        self.typing_w = jax.random.uniform(
            key, (num_labels, HIDDEN), jnp.float32, -bound, bound)

    def __call__(self, input_ids, token_type_ids=None, attention_mask=None,
                 input_ent=None, ent_mask=None, labels=None):
        cls_out = synthetic_bert_cls(
            self.bert_params, input_ids, token_type_ids, attention_mask,
            input_ent, ent_mask)
        pw = self.bert_params["pooler_w"]
        pb = self.bert_params["pooler_b"]
        if labels is not None:
            return typing_bce_loss(cls_out, pw, pb, self.typing_w,
                                   labels.reshape(-1, self.num_labels))
        return typing_logits(cls_out, pw, pb, self.typing_w)


if __name__ == "__main__":
    B, S, VOCAB, ENT_DIM, NUM_LABELS = 2, 8, 64, 32, 16

    root = jax.random.PRNGKey(0)
    k = jax.random.split(root, 10)

    bert_params = {
        "word_emb": 0.02 * jax.random.normal(k[0], (VOCAB, HIDDEN), jnp.float32),
        "type_emb": 0.02 * jax.random.normal(k[1], (2, HIDDEN), jnp.float32),
        "ent_proj": 0.02 * jax.random.normal(k[2], (ENT_DIM, HIDDEN), jnp.float32),
        "pooler_w": 0.02 * jax.random.normal(k[3], (HIDDEN, HIDDEN), jnp.float32),
        "pooler_b": jnp.zeros((HIDDEN,), jnp.float32),
    }

    model = BertForEntityTypingPallas(bert_params, num_labels=NUM_LABELS, key=k[4])

    input_ids = jax.random.randint(k[5], (B, S), 0, VOCAB, dtype=jnp.int32)
    token_type_ids = jnp.zeros((B, S), jnp.int32)
    attention_mask = jnp.ones((B, S), jnp.float32).at[:, S - 2:].set(0.0)
    input_ent = jax.random.normal(k[6], (B, S, ENT_DIM), jnp.float32)
    ent_mask = (jax.random.uniform(k[7], (B, S)) > 0.5).astype(jnp.float32)
    labels = (jax.random.uniform(k[8], (B, NUM_LABELS)) > 0.7).astype(jnp.float32)

    # labels branch -> scalar BCEWithLogits loss
    loss = model(input_ids, token_type_ids, attention_mask, input_ent, ent_mask,
                 labels=labels)
    loss = jax.block_until_ready(loss)

    # no-labels branch -> logits [B, num_labels]
    logits = model(input_ids, token_type_ids, attention_mask, input_ent, ent_mask)
    logits = jax.block_until_ready(logits)

    # pure-JAX f32 reference (kernel feeds the MXU in bf16 -> loose tolerance)
    cls_ref = synthetic_bert_cls(bert_params, input_ids, token_type_ids,
                                 attention_mask, input_ent, ent_mask).astype(jnp.float32)
    pooled_ref = jnp.tanh(cls_ref @ bert_params["pooler_w"] + bert_params["pooler_b"])
    logits_ref = pooled_ref @ model.typing_w.T
    z, y = logits_ref, labels
    loss_ref = jnp.mean(jnp.maximum(z, 0.0) - z * y + jnp.log1p(jnp.exp(-jnp.abs(z))))

    assert logits.shape == (B, NUM_LABELS)
    assert loss.shape == ()
    assert jnp.allclose(logits, logits_ref, atol=5e-2, rtol=5e-2)
    assert jnp.allclose(loss, loss_ref, atol=5e-2, rtol=5e-2)
    print("KERNEL_OK")
</pallas_src>

<mosaic_0001>
module attributes {stable_mosaic.version = 11 : i64} {
  func.func @_loss_kernel(%arg0: i32, %arg1: memref<16x768xbf16, #tpu.memory_space<vmem>>, %arg2: memref<768x768xbf16, #tpu.memory_space<vmem>>, %arg3: memref<1x768xf32, #tpu.memory_space<vmem>>, %arg4: memref<768x128xbf16, #tpu.memory_space<vmem>>, %arg5: memref<16x128xbf16, #tpu.memory_space<vmem>>, %arg6: memref<1x8x128xf32, #tpu.memory_space<vmem>>) attributes {dimension_semantics = [#tpu.dimension_semantics<parallel>], iteration_bounds = array<i64: 1>, scalar_prefetch = 0 : i64, scratch_operands = 0 : i64, tpu.core_type = #tpu.core_type<tc>, window_params = [{transform_indices = @transform_0, window_bounds = array<i64: 16, 768>}, {pipeline_mode = #tpu.pipeline_mode<synchronous>, transform_indices = @transform_1, window_bounds = array<i64: 768, 768>}, {pipeline_mode = #tpu.pipeline_mode<synchronous>, transform_indices = @transform_2, window_bounds = array<i64: 1, 768>}, {pipeline_mode = #tpu.pipeline_mode<synchronous>, transform_indices = @transform_3, window_bounds = array<i64: 768, 128>}, {transform_indices = @transform_4, window_bounds = array<i64: 16, 128>}, {transform_indices = @transform_5, window_bounds = array<i64: 1, 8, 128>}]} {
    %c0 = arith.constant 0 : index
    %c0_0 = arith.constant 0 : index
    %0 = vector.load %arg1[%c0, %c0_0] : memref<16x768xbf16, #tpu.memory_space<vmem>>, vector<16x768xbf16>
    %c0_1 = arith.constant 0 : index
    %c0_2 = arith.constant 0 : index
    %1 = vector.load %arg2[%c0_1, %c0_2] : memref<768x768xbf16, #tpu.memory_space<vmem>>, vector<768x768xbf16>
    %cst = arith.constant dense<0.000000e+00> : vector<16x768xf32>
    %2 = tpu.matmul %0, %1, %cst {dimension_numbers = #tpu.dot_dimension_numbers<[1], [0], [0], [1], [0, 0, 1, 1], [], []>} : vector<16x768xbf16>, vector<768x768xbf16>, vector<16x768xf32> -> vector<16x768xf32>
    %c0_3 = arith.constant 0 : index
    %c0_4 = arith.constant 0 : index
    %3 = vector.load %arg3[%c0_3, %c0_4] : memref<1x768xf32, #tpu.memory_space<vmem>>, vector<1x768xf32>
    %4 = vector.broadcast %3 : vector<1x768xf32> to vector<16x768xf32>
    %5 = arith.addf %2, %4 : vector<16x768xf32>
    %6 = math.tanh %5 : vector<16x768xf32>
    %7 = arith.truncf %6 : vector<16x768xf32> to vector<16x768xbf16>
    %c0_5 = arith.constant 0 : index
    %c0_6 = arith.constant 0 : index
    %8 = vector.load %arg4[%c0_5, %c0_6] : memref<768x128xbf16, #tpu.memory_space<vmem>>, vector<768x128xbf16>
    %cst_7 = arith.constant dense<0.000000e+00> : vector<16x128xf32>
    %9 = tpu.matmul %7, %8, %cst_7 {dimension_numbers = #tpu.dot_dimension_numbers<[1], [0], [0], [1], [0, 0, 1, 1], [], []>} : vector<16x768xbf16>, vector<768x128xbf16>, vector<16x128xf32> -> vector<16x128xf32>
    %c0_8 = arith.constant 0 : index
    %c0_9 = arith.constant 0 : index
    %10 = vector.load %arg5[%c0_8, %c0_9] : memref<16x128xbf16, #tpu.memory_space<vmem>>, vector<16x128xbf16>
    %11 = arith.extf %10 : vector<16x128xbf16> to vector<16x128xf32>
    %cst_10 = arith.constant 0.000000e+00 : f32
    %12 = vector.broadcast %cst_10 : f32 to vector<16x128xf32>
    %13 = arith.maximumf %9, %12 : vector<16x128xf32>
    %14 = arith.mulf %9, %11 : vector<16x128xf32>
    %15 = arith.subf %13, %14 : vector<16x128xf32>
    %16 = math.absf %9 : vector<16x128xf32>
    %cst_11 = arith.constant 0.000000e+00 : f32
    %17 = vector.broadcast %cst_11 : f32 to vector<16x128xf32>
    %18 = arith.subf %17, %16 : vector<16x128xf32>
    %19 = math.exp %18 : vector<16x128xf32>
    %20 = math.log1p %19 : vector<16x128xf32>
    %21 = arith.addf %15, %20 : vector<16x128xf32>
    %c16_i32 = arith.constant 16 : i32
    %22 = arith.muli %arg0, %c16_i32 : i32
    %23 = tpu.iota {dimensions = array<i32: 0>} : vector<16x128xi32>
    %24 = vector.broadcast %22 : i32 to vector<16x128xi32>
    %25 = arith.addi %24, %23 : vector<16x128xi32>
    %26 = tpu.iota {dimensions = array<i32: 1>} : vector<16x128xi32>
    %c2_i32 = arith.constant 2 : i32
    %27 = vector.broadcast %c2_i32 : i32 to vector<16x128xi32>
    %28 = arith.cmpi slt, %25, %27 : vector<16x128xi32>
    %c16_i32_12 = arith.constant 16 : i32
    %29 = vector.broadcast %c16_i32_12 : i32 to vector<16x128xi32>
    %30 = arith.cmpi slt, %26, %29 : vector<16x128xi32>
    %31 = arith.andi %28, %30 : vector<16x128xi1>
    %cst_13 = arith.constant 0.000000e+00 : f32
    %32 = vector.broadcast %cst_13 : f32 to vector<16x128xf32>
    %33 = arith.select %31, %21, %32 : vector<16x128xi1>, vector<16x128xf32>
    %34 = vector.shape_cast %33 : vector<16x128xf32> to vector<1x2x8x128xf32>
    %cst_14 = arith.constant dense<0.000000e+00> : vector<1x8x128xf32>
    %35 = vector.multi_reduction <add>, %34, %cst_14 [1] : vector<1x2x8x128xf32> to vector<1x8x128xf32>
    %c0_15 = arith.constant 0 : index
    %c0_16 = arith.constant 0 : index
    %c0_17 = arith.constant 0 : index
    %36 = vector.load %arg6[%c0_15, %c0_16, %c0_17] : memref<1x8x128xf32, #tpu.memory_space<vmem>>, vector<1x8x128xf32>
    tpu.vector_store %arg6[%c0_15, %c0_16, %c0_17], %35 {strides = array<i32>} : memref<1x8x128xf32, #tpu.memory_space<vmem>>, vector<1x8x128xf32>,
    return
  }
  func.func @transform_0(%arg0: i32) -> (i32, i32) {
    %c0_i32 = arith.constant 0 : i32
    %c0_i32_0 = arith.constant 0 : i32
    return %arg0, %c0_i32 : i32, i32
  }
  func.func @transform_1(%arg0: i32) -> (i32, i32) {
    %c0_i32 = arith.constant 0 : i32
    %c0_i32_0 = arith.constant 0 : i32
    %c0_i32_1 = arith.constant 0 : i32
    return %c0_i32, %c0_i32_0 : i32, i32
  }
  func.func @transform_2(%arg0: i32) -> (i32, i32) {
    %c0_i32 = arith.constant 0 : i32
    %c0_i32_0 = arith.constant 0 : i32
    %c0_i32_1 = arith.constant 0 : i32
    return %c0_i32, %c0_i32_0 : i32, i32
  }
  func.func @transform_3(%arg0: i32) -> (i32, i32) {
    %c0_i32 = arith.constant 0 : i32
    %c0_i32_0 = arith.constant 0 : i32
    %c0_i32_1 = arith.constant 0 : i32
    return %c0_i32, %c0_i32_0 : i32, i32
  }
  func.func @transform_4(%arg0: i32) -> (i32, i32) {
    %c0_i32 = arith.constant 0 : i32
    %c0_i32_0 = arith.constant 0 : i32
    return %arg0, %c0_i32 : i32, i32
  }
  func.func @transform_5(%arg0: i32) -> (i32, i32, i32) {
    %c0_i32 = arith.constant 0 : i32
    %c0_i32_0 = arith.constant 0 : i32
    %c0_i32_1 = arith.constant 0 : i32
    return %arg0, %c0_i32, %c0_i32_0 : i32, i32, i32
  }
}

</mosaic_0001>

<llo_original>
// kernel: tpu_custom_call.1
$region0: #{tpu_custom_call.1}
  #allocation0 [shape = 'u32[]', space=smem, size = 0x4, offset = 0x4, fixed_abs, tag = 'smem constant byte address 0x4 - core index']
  #allocation1 [shape = 'u32[144,128]{1,0:T(1,128)}', space=vmem, size = 0x12000, scoped, tag = 'internal scratch']
  %s0 = inlined_call_operand.hbm [shape: bf16[16,768], index: 0, kind: input, shape index: {}]
  %s1 = inlined_call_operand.hbm [shape: bf16[768,768], index: 1, kind: input, shape index: {}]
  %s2 = inlined_call_operand.hbm [shape: f32[1,768], index: 2, kind: input, shape index: {}]
  %s3 = inlined_call_operand.hbm [shape: bf16[768,128], index: 3, kind: input, shape index: {}]
  %s4 = inlined_call_operand.hbm [shape: bf16[16,128], index: 4, kind: input, shape index: {}]
  %s5 = inlined_call_operand.hbm [shape: f32[1,8,128], index: 5, kind: output, shape index: {}]
  %s6 = sld [smem:[#allocation0]]
  $region50: #{tpu_custom_call.1} parent=0
    _
  %s8 = ssub.s32 1, %s6
  %s9 = scalar_select 0, %s8, %s6
  $region1: #{tpu_custom_call.1} parent=0
    #allocation2 [shape = 'u8[24576]{0}', space=vmem, size = 0x6000, scoped, tag = 'input window, operand 0, single buffered']
    #allocation3 [shape = 's32[1]{0}', space=sflag, size = 0x4, scoped, tag = 'scoped memory for tpu_custom_call.1']
    #allocation4 [shape = 's32[1]{0}', space=sflag, size = 0x4, scoped, tag = 'scoped memory for tpu_custom_call.1']
    #allocation5 [shape = 'u8[1179648]{0}', space=vmem, size = 0x120000, scoped, tag = 'input window, operand 1, single buffered']
    #allocation6 [shape = 's32[1]{0}', space=sflag, size = 0x4, scoped, tag = 'scoped memory for tpu_custom_call.1']
    #allocation7 [shape = 'u8[3072]{0}', space=vmem, size = 0xc00, scoped, tag = 'input window, operand 2, single buffered']
    #allocation8 [shape = 'u8[196608]{0}', space=vmem, size = 0x30000, scoped, tag = 'input window, operand 3, single buffered']
    #allocation9 [shape = 's32[1]{0}', space=sflag, size = 0x4, scoped, tag = 'scoped memory for tpu_custom_call.1']
    #allocation10 [shape = 'u8[4096]{0}', space=vmem, size = 0x1000, scoped, tag = 'input window, operand 4, single buffered']
    #allocation11 [shape = 'u8[4096]{0}', space=vmem, size = 0x1000, scoped, tag = 'output window, operand 0, single buffered']
    %10 = vsyncpa [#allocation3], 0
    %11 = vsyncpa [#allocation6], 0
    %12 = vsyncpa [#allocation9], 0
    %13 = vsyncpa [#allocation4], 0
    // Predicated region
    $region2: #{tpu_custom_call.1} parent=1 // pred_check
      _
    $region3: #{tpu_custom_call.1} parent=1 // pred_check_branch
      %15 = sbr.rel (0) target = $region5
    $region4: #{tpu_custom_call.1} parent=1 // pred_region
      %s17 = ssub.s32 768, 768
      %18 = vsyncadd [#allocation3], %s17
      %s19 = sshll.u32 [#allocation2], 4
      %s20 = int_to_ptr.vmem [resolvable:$true] %s19
      %25 = dma.hbm_to_vmem [thread:$0]  %s0, 768, %s20, [#allocation3], 384, 384, 24
    $region5: #{tpu_custom_call.1} parent=1 // pred_fallthru
      _
    // Predicated region
    $region6: #{tpu_custom_call.1} parent=1 // pred_check
      _
    $region7: #{tpu_custom_call.1} parent=1 // pred_check_branch
      %27 = sbr.rel (0) target = $region9
    $region8: #{tpu_custom_call.1} parent=1 // pred_region
      %s29 = ssub.s32 36864, 36864
      %30 = vsyncadd [#allocation6], %s29
      %s31 = sshll.u32 [#allocation5], 4
      %s32 = int_to_ptr.vmem [resolvable:$true] %s31
      %37 = dma.hbm_to_vmem [thread:$0]  %s1, 36864, %s32, [#allocation6], 384, 384, 24
    $region9: #{tpu_custom_call.1} parent=1 // pred_fallthru
      _
    // Predicated region
    $region10: #{tpu_custom_call.1} parent=1 // pred_check
      _
    $region11: #{tpu_custom_call.1} parent=1 // pred_check_branch
      %39 = sbr.rel (0) target = $region13
    $region12: #{tpu_custom_call.1} parent=1 // pred_region
      %s41 = ssub.s32 96, 96
      %42 = vsyncadd [#allocation6], %s41
      %s44 = sshll.u32 [#allocation7], 4
      %s45 = int_to_ptr.vmem [resolvable:$true] %s44
      %47 = dma.hbm_to_vmem [thread:$0]  %s2, 96, %s45, [#allocation6]
    $region13: #{tpu_custom_call.1} parent=1 // pred_fallthru
      _
    // Predicated region
    $region14: #{tpu_custom_call.1} parent=1 // pred_check
      _
    $region15: #{tpu_custom_call.1} parent=1 // pred_check_branch
      %49 = sbr.rel (0) target = $region17
    $region16: #{tpu_custom_call.1} parent=1 // pred_region
      %s51 = ssub.s32 6144, 6144
      %52 = vsyncadd [#allocation9], %s51
      %s53 = sshll.u32 [#allocation8], 4
      %s54 = int_to_ptr.vmem [resolvable:$true] %s53
      %59 = dma.hbm_to_vmem [thread:$0]  %s3, 6144, %s54, [#allocation9], 64, 64, 4
    $region17: #{tpu_custom_call.1} parent=1 // pred_fallthru
      _
    // Predicated region
    $region18: #{tpu_custom_call.1} parent=1 // pred_check
      _
    $region19: #{tpu_custom_call.1} parent=1 // pred_check_branch
      %61 = sbr.rel (0) target = $region21
    $region20: #{tpu_custom_call.1} parent=1 // pred_region
      %s63 = ssub.s32 128, 128
      %64 = vsyncadd [#allocation9], %s63
      %s65 = sshll.u32 [#allocation10], 4
      %s66 = int_to_ptr.vmem [resolvable:$true] %s65
      %71 = dma.hbm_to_vmem [thread:$0]  %s4, 128, %s66, [#allocation9], 64, 64, 4
    $region21: #{tpu_custom_call.1} parent=1 // pred_fallthru
      _
    // Predicated region
    $region22: #{tpu_custom_call.1} parent=1 // pred_check
      _
    $region23: #{tpu_custom_call.1} parent=1 // pred_check_branch
      %73 = sbr.rel (0) target = $region25
    $region24: #{tpu_custom_call.1} parent=1 // pred_region
      %74 = dma.done [#allocation3], 768
    $region25: #{tpu_custom_call.1} parent=1 // pred_fallthru
      _
    // Predicated region
    $region26: #{tpu_custom_call.1} parent=1 // pred_check
      _
    $region27: #{tpu_custom_call.1} parent=1 // pred_check_branch
      %76 = sbr.rel (0) target = $region29
    $region28: #{tpu_custom_call.1} parent=1 // pred_region
      %77 = dma.done [#allocation6], 36864
    $region29: #{tpu_custom_call.1} parent=1 // pred_fallthru
      _
    // Predicated region
    $region30: #{tpu_custom_call.1} parent=1 // pred_check
      _
    $region31: #{tpu_custom_call.1} parent=1 // pred_check_branch
      %79 = sbr.rel (0) target = $region33
    $region32: #{tpu_custom_call.1} parent=1 // pred_region
      %80 = dma.done [#allocation6], 96
    $region33: #{tpu_custom_call.1} parent=1 // pred_fallthru
      _
    // Predicated region
    $region34: #{tpu_custom_call.1} parent=1 // pred_check
      _
    $region35: #{tpu_custom_call.1} parent=1 // pred_check_branch
      %82 = sbr.rel (0) target = $region37
    $region36: #{tpu_custom_call.1} parent=1 // pred_region
      %83 = dma.done [#allocation9], 6144
    $region37: #{tpu_custom_call.1} parent=1 // pred_fallthru
      _
    // Predicated region
    $region38: #{tpu_custom_call.1} parent=1 // pred_check
      _
    $region39: #{tpu_custom_call.1} parent=1 // pred_check_branch
      %85 = sbr.rel (0) target = $region41
    $region40: #{tpu_custom_call.1} parent=1 // pred_region
      %86 = dma.done [#allocation9], 128
    $region41: #{tpu_custom_call.1} parent=1 // pred_fallthru
      _
    %v88 = vld [vmem:[#allocation2] sm:$0xff]
    %v89 = vld [vmem:[#allocation2 + $0x8] sm:$0xff]
    %v90 = vld [vmem:[#allocation2 + $0x10] sm:$0xff]
    %v91 = vld [vmem:[#allocation2 + $0x18] sm:$0xff]
    %v92 = vld [vmem:[#allocation2 + $0x20] sm:$0xff]
    %v93 = vld [vmem:[#allocation2 + $0x28] sm:$0xff]
    %v94 = vld [vmem:[#allocation5] sm:$0xff]
    %v95 = vld [vmem:[#allocation5 + $0x8] sm:$0xff]
    %v96 = vld [vmem:[#allocation5 + $0x10] sm:$0xff]
    %v97 = vld [vmem:[#allocation5 + $0x18] sm:$0xff]
    %v98 = vld [vmem:[#allocation5 + $0x20] sm:$0xff]
    %v99 = vld [vmem:[#allocation5 + $0x28] sm:$0xff]
    %v100 = vld [vmem:[#allocation5 + $0x30] sm:$0xff]
    %v101 = vld [vmem:[#allocation5 + $0x38] sm:$0xff]
    %v102 = vld [vmem:[#allocation5 + $0x40] sm:$0xff]
    %v103 = vld [vmem:[#allocation5 + $0x48] sm:$0xff]
    %v104 = vld [vmem:[#allocation5 + $0x50] sm:$0xff]
    %v105 = vld [vmem:[#allocation5 + $0x58] sm:$0xff]
    %v106 = vld [vmem:[#allocation5 + $0x60] sm:$0xff]
    %v107 = vld [vmem:[#allocation5 + $0x68] sm:$0xff]
    %v108 = vld [vmem:[#allocation5 + $0x70] sm:$0xff]
    %v109 = vld [vmem:[#allocation5 + $0x78] sm:$0xff]
    %v110 = vld [vmem:[#allocation5 + $0x80] sm:$0xff]
    %v111 = vld [vmem:[#allocation5 + $0x88] sm:$0xff]
    %v112 = vld [vmem:[#allocation5 + $0x90] sm:$0xff]
    %v113 = vld [vmem:[#allocation5 + $0x98] sm:$0xff]
    %v114 = vld [vmem:[#allocation5 + $0xa0] sm:$0xff]
    %v115 = vld [vmem:[#allocation5 + $0xa8] sm:$0xff]
    %v116 = vld [vmem:[#allocation5 + $0xb0] sm:$0xff]
    %v117 = vld [vmem:[#allocation5 + $0xb8] sm:$0xff]
    %v118 = vld [vmem:[#allocation5 + $0xc0] sm:$0xff]
    %v119 = vld [vmem:[#allocation5 + $0xc8] sm:$0xff]
    %v120 = vld [vmem:[#allocation5 + $0xd0] sm:$0xff]
    %v121 = vld [vmem:[#allocation5 + $0xd8] sm:$0xff]
    %v122 = vld [vmem:[#allocation5 + $0xe0] sm:$0xff]
    %v123 = vld [vmem:[#allocation5 + $0xe8] sm:$0xff]
    %v124 = vld [vmem:[#allocation5 + $0xf0] sm:$0xff]
    %v125 = vld [vmem:[#allocation5 + $0xf8] sm:$0xff]
    %v126 = vld [vmem:[#allocation5 + $0x100] sm:$0xff]
    %v127 = vld [vmem:[#allocation5 + $0x108] sm:$0xff]
    %v128 = vld [vmem:[#allocation5 + $0x110] sm:$0xff]
    %v129 = vld [vmem:[#allocation5 + $0x118] sm:$0xff]
    %v130 = vld [vmem:[#allocation5 + $0x120] sm:$0xff]
    %v131 = vld [vmem:[#allocation5 + $0x128] sm:$0xff]
    %v132 = vld [vmem:[#allocation5 + $0x130] sm:$0xff]
    %v133 = vld [vmem:[#allocation5 + $0x138] sm:$0xff]
    %v134 = vld [vmem:[#allocation5 + $0x140] sm:$0xff]
    %v135 = vld [vmem:[#allocation5 + $0x148] sm:$0xff]
    %v136 = vld [vmem:[#allocation5 + $0x150] sm:$0xff]
    %v137 = vld [vmem:[#allocation5 + $0x158] sm:$0xff]
    %v138 = vld [vmem:[#allocation5 + $0x160] sm:$0xff]
    %v139 = vld [vmem:[#allocation5 + $0x168] sm:$0xff]
    %v140 = vld [vmem:[#allocation5 + $0x170] sm:$0xff]
    %v141 = vld [vmem:[#allocation5 + $0x178] sm:$0xff]
    %v142 = vld [vmem:[#allocation5 + $0x180] sm:$0xff]
    %v143 = vld [vmem:[#allocation5 + $0x188] sm:$0xff]
    %v144 = vld [vmem:[#allocation5 + $0x190] sm:$0xff]
    %v145 = vld [vmem:[#allocation5 + $0x198] sm:$0xff]
    %v146 = vld [vmem:[#allocation5 + $0x1a0] sm:$0xff]
    %v147 = vld [vmem:[#allocation5 + $0x1a8] sm:$0xff]
    %v148 = vld [vmem:[#allocation5 + $0x1b0] sm:$0xff]
    %v149 = vld [vmem:[#allocation5 + $0x1b8] sm:$0xff]
    %v150 = vld [vmem:[#allocation5 + $0x1c0] sm:$0xff]
    %v151 = vld [vmem:[#allocation5 + $0x1c8] sm:$0xff]
    %v152 = vld [vmem:[#allocation5 + $0x1d0] sm:$0xff]
    %v153 = vld [vmem:[#allocation5 + $0x1d8] sm:$0xff]
    %v154 = vld [vmem:[#allocation5 + $0x1e0] sm:$0xff]
    %v155 = vld [vmem:[#allocation5 + $0x1e8] sm:$0xff]
    %v156 = vld [vmem:[#allocation5 + $0x1f0] sm:$0xff]
    %v157 = vld [vmem:[#allocation5 + $0x1f8] sm:$0xff]
    %v158 = vld [vmem:[#allocation5 + $0x200] sm:$0xff]
    %v159 = vld [vmem:[#allocation5 + $0x208] sm:$0xff]
    %v160 = vld [vmem:[#allocation5 + $0x210] sm:$0xff]
    %v161 = vld [vmem:[#allocation5 + $0x218] sm:$0xff]
    %v162 = vld [vmem:[#allocation5 + $0x220] sm:$0xff]
    %v163 = vld [vmem:[#allocation5 + $0x228] sm:$0xff]
    %v164 = vld [vmem:[#allocation5 + $0x230] sm:$0xff]
    %v165 = vld [vmem:[#allocation5 + $0x238] sm:$0xff]
    %v166 = vld [vmem:[#allocation5 + $0x240] sm:$0xff]
    %v167 = vld [vmem:[#allocation5 + $0x248] sm:$0xff]
    %v168 = vld [vmem:[#allocation5 + $0x250] sm:$0xff]
    %v169 = vld [vmem:[#allocation5 + $0x258] sm:$0xff]
    %v170 = vld [vmem:[#allocation5 + $0x260] sm:$0xff]
    %v171 = vld [vmem:[#allocation5 + $0x268] sm:$0xff]
    %v172 = vld [vmem:[#allocation5 + $0x270] sm:$0xff]
    %v173 = vld [vmem:[#allocation5 + $0x278] sm:$0xff]
    %v174 = vld [vmem:[#allocation5 + $0x280] sm:$0xff]
    %v175 = vld [vmem:[#allocation5 + $0x288] sm:$0xff]
    %v176 = vld [vmem:[#allocation5 + $0x290] sm:$0xff]
    %v177 = vld [vmem:[#allocation5 + $0x298] sm:$0xff]
    %v178 = vld [vmem:[#allocation5 + $0x2a0] sm:$0xff]
    %v179 = vld [vmem:[#allocation5 + $0x2a8] sm:$0xff]
    %v180 = vld [vmem:[#allocation5 + $0x2b0] sm:$0xff]
    %v181 = vld [vmem:[#allocation5 + $0x2b8] sm:$0xff]
    %v182 = vld [vmem:[#allocation5 + $0x2c0] sm:$0xff]
    %v183 = vld [vmem:[#allocation5 + $0x2c8] sm:$0xff]
    %v184 = vld [vmem:[#allocation5 + $0x2d0] sm:$0xff]
    %v185 = vld [vmem:[#allocation5 + $0x2d8] sm:$0xff]
    %v186 = vld [vmem:[#allocation5 + $0x2e0] sm:$0xff]
    %v187 = vld [vmem:[#allocation5 + $0x2e8] sm:$0xff]
    %v188 = vld [vmem:[#allocation5 + $0x2f0] sm:$0xff]
    %v189 = vld [vmem:[#allocation5 + $0x2f8] sm:$0xff]
    %v190 = vld [vmem:[#allocation5 + $0x300] sm:$0xff]
    %v191 = vld [vmem:[#allocation5 + $0x308] sm:$0xff]
    %v192 = vld [vmem:[#allocation5 + $0x310] sm:$0xff]
    %v193 = vld [vmem:[#allocation5 + $0x318] sm:$0xff]
    %v194 = vld [vmem:[#allocation5 + $0x320] sm:$0xff]
    %v195 = vld [vmem:[#allocation5 + $0x328] sm:$0xff]
    %v196 = vld [vmem:[#allocation5 + $0x330] sm:$0xff]
    %v197 = vld [vmem:[#allocation5 + $0x338] sm:$0xff]
    %v198 = vld [vmem:[#allocation5 + $0x340] sm:$0xff]
    %v199 = vld [vmem:[#allocation5 + $0x348] sm:$0xff]
    %v200 = vld [vmem:[#allocation5 + $0x350] sm:$0xff]
    %v201 = vld [vmem:[#allocation5 + $0x358] sm:$0xff]
    %v202 = vld [vmem:[#allocation5 + $0x360] sm:$0xff]
    %v203 = vld [vmem:[#allocation5 + $0x368] sm:$0xff]
    %v204 = vld [vmem:[#allocation5 + $0x370] sm:$0xff]
    %v205 = vld [vmem:[#allocation5 + $0x378] sm:$0xff]
    %v206 = vld [vmem:[#allocation5 + $0x380] sm:$0xff]
    %v207 = vld [vmem:[#allocation5 + $0x388] sm:$0xff]
    %v208 = vld [vmem:[#allocation5 + $0x390] sm:$0xff]
    %v209 = vld [vmem:[#allocation5 + $0x398] sm:$0xff]
    %v210 = vld [vmem:[#allocation5 + $0x3a0] sm:$0xff]
    %v211 = vld [vmem:[#allocation5 + $0x3a8] sm:$0xff]
    %v212 = vld [vmem:[#allocation5 + $0x3b0] sm:$0xff]
    %v213 = vld [vmem:[#allocation5 + $0x3b8] sm:$0xff]
    %v214 = vld [vmem:[#allocation5 + $0x3c0] sm:$0xff]
    %v215 = vld [vmem:[#allocation5 + $0x3c8] sm:$0xff]
    %v216 = vld [vmem:[#allocation5 + $0x3d0] sm:$0xff]
    %v217 = vld [vmem:[#allocation5 + $0x3d8] sm:$0xff]
    %v218 = vld [vmem:[#allocation5 + $0x3e0] sm:$0xff]
    %v219 = vld [vmem:[#allocation5 + $0x3e8] sm:$0xff]
    %v220 = vld [vmem:[#allocation5 + $0x3f0] sm:$0xff]
    %v221 = vld [vmem:[#allocation5 + $0x3f8] sm:$0xff]
    %v222 = vld [vmem:[#allocation5 + $0x400] sm:$0xff]
    %v223 = vld [vmem:[#allocation5 + $0x408] sm:$0xff]
    %v224 = vld [vmem:[#allocation5 + $0x410] sm:$0xff]
    %v225 = vld [vmem:[#allocation5 + $0x418] sm:$0xff]
    %v226 = vld [vmem:[#allocation5 + $0x420] sm:$0xff]
    %v227 = vld [vmem:[#allocation5 + $0x428] sm:$0xff]
    %v228 = vld [vmem:[#allocation5 + $0x430] sm:$0xff]
    %v229 = vld [vmem:[#allocation5 + $0x438] sm:$0xff]
    %v230 = vld [vmem:[#allocation5 + $0x440] sm:$0xff]
    %v231 = vld [vmem:[#allocation5 + $0x448] sm:$0xff]
    %v232 = vld [vmem:[#allocation5 + $0x450] sm:$0xff]
    %v233 = vld [vmem:[#allocation5 + $0x458] sm:$0xff]
    %v234 = vld [vmem:[#allocation5 + $0x460] sm:$0xff]
    %v235 = vld [vmem:[#allocation5 + $0x468] sm:$0xff]
    %v236 = vld [vmem:[#allocation5 + $0x470] sm:$0xff]
    %v237 = vld [vmem:[#allocation5 + $0x478] sm:$0xff]
    %v238 = vld [vmem:[#allocation5 + $0x480] sm:$0xff]
    %v239 = vld [vmem:[#allocation5 + $0x488] sm:$0xff]
    %v240 = vld [vmem:[#allocation5 + $0x490] sm:$0xff]
    %v241 = vld [vmem:[#allocation5 + $0x498] sm:$0xff]
    %v242 = vld [vmem:[#allocation5 + $0x4a0] sm:$0xff]
    %v243 = vld [vmem:[#allocation5 + $0x4a8] sm:$0xff]
    %v244 = vld [vmem:[#allocation5 + $0x4b0] sm:$0xff]
    %v245 = vld [vmem:[#allocation5 + $0x4b8] sm:$0xff]
    %v246 = vld [vmem:[#allocation5 + $0x4c0] sm:$0xff]
    %v247 = vld [vmem:[#allocation5 + $0x4c8] sm:$0xff]
    %v248 = vld [vmem:[#allocation5 + $0x4d0] sm:$0xff]
    %v249 = vld [vmem:[#allocation5 + $0x4d8] sm:$0xff]
    %v250 = vld [vmem:[#allocation5 + $0x4e0] sm:$0xff]
    %v251 = vld [vmem:[#allocation5 + $0x4e8] sm:$0xff]
    %v252 = vld [vmem:[#allocation5 + $0x4f0] sm:$0xff]
    %v253 = vld [vmem:[#allocation5 + $0x4f8] sm:$0xff]
    %v254 = vld [vmem:[#allocation5 + $0x500] sm:$0xff]
    %v255 = vld [vmem:[#allocation5 + $0x508] sm:$0xff]
    %v256 = vld [vmem:[#allocation5 + $0x510] sm:$0xff]
    %v257 = vld [vmem:[#allocation5 + $0x518] sm:$0xff]
    %v258 = vld [vmem:[#allocation5 + $0x520] sm:$0xff]
    %v259 = vld [vmem:[#allocation5 + $0x528] sm:$0xff]
    %v260 = vld [vmem:[#allocation5 + $0x530] sm:$0xff]
    %v261 = vld [vmem:[#allocation5 + $0x538] sm:$0xff]
    %v262 = vld [vmem:[#allocation5 + $0x540] sm:$0xff]
    %v263 = vld [vmem:[#allocation5 + $0x548] sm:$0xff]
    %v264 = vld [vmem:[#allocation5 + $0x550] sm:$0xff]
    %v265 = vld [vmem:[#allocation5 + $0x558] sm:$0xff]
    %v266 = vld [vmem:[#allocation5 + $0x560] sm:$0xff]
    %v267 = vld [vmem:[#allocation5 + $0x568] sm:$0xff]
    %v268 = vld [vmem:[#allocation5 + $0x570] sm:$0xff]
    %v269 = vld [vmem:[#allocation5 + $0x578] sm:$0xff]
    %v270 = vld [vmem:[#allocation5 + $0x580] sm:$0xff]
    %v271 = vld [vmem:[#allocation5 + $0x588] sm:$0xff]
    %v272 = vld [vmem:[#allocation5 + $0x590] sm:$0xff]
    %v273 = vld [vmem:[#allocation5 + $0x598] sm:$0xff]
    %v274 = vld [vmem:[#allocation5 + $0x5a0] sm:$0xff]
    %v275 = vld [vmem:[#allocation5 + $0x5a8] sm:$0xff]
    %v276 = vld [vmem:[#allocation5 + $0x5b0] sm:$0xff]
    %v277 = vld [vmem:[#allocation5 + $0x5b8] sm:$0xff]
    %v278 = vld [vmem:[#allocation5 + $0x5c0] sm:$0xff]
    %v279 = vld [vmem:[#allocation5 + $0x5c8] sm:$0xff]
    %v280 = vld [vmem:[#allocation5 + $0x5d0] sm:$0xff]
    %v281 = vld [vmem:[#allocation5 + $0x5d8] sm:$0xff]
    %v282 = vld [vmem:[#allocation5 + $0x5e0] sm:$0xff]
    %v283 = vld [vmem:[#allocation5 + $0x5e8] sm:$0xff]
    %v284 = vld [vmem:[#allocation5 + $0x5f0] sm:$0xff]
    %v285 = vld [vmem:[#allocation5 + $0x5f8] sm:$0xff]
    %v286 = vld [vmem:[#allocation5 + $0x600] sm:$0xff]
    %v287 = vld [vmem:[#allocation5 + $0x608] sm:$0xff]
    %v288 = vld [vmem:[#allocation5 + $0x610] sm:$0xff]
    %v289 = vld [vmem:[#allocation5 + $0x618] sm:$0xff]
    %v290 = vld [vmem:[#allocation5 + $0x620] sm:$0xff]
    %v291 = vld [vmem:[#allocation5 + $0x628] sm:$0xff]
    %v292 = vld [vmem:[#allocation5 + $0x630] sm:$0xff]
    %v293 = vld [vmem:[#allocation5 + $0x638] sm:$0xff]
    %v294 = vld [vmem:[#allocation5 + $0x640] sm:$0xff]
    %v295 = vld [vmem:[#allocation5 + $0x648] sm:$0xff]
    %v296 = vld [vmem:[#allocation5 + $0x650] sm:$0xff]
    %v297 = vld [vmem:[#allocation5 + $0x658] sm:$0xff]
    %v298 = vld [vmem:[#allocation5 + $0x660] sm:$0xff]
    %v299 = vld [vmem:[#allocation5 + $0x668] sm:$0xff]
    %v300 = vld [vmem:[#allocation5 + $0x670] sm:$0xff]
    %v301 = vld [vmem:[#allocation5 + $0x678] sm:$0xff]
    %v302 = vld [vmem:[#allocation5 + $0x680] sm:$0xff]
    %v303 = vld [vmem:[#allocation5 + $0x688] sm:$0xff]
    %v304 = vld [vmem:[#allocation5 + $0x690] sm:$0xff]
    %v305 = vld [vmem:[#allocation5 + $0x698] sm:$0xff]
    %v306 = vld [vmem:[#allocation5 + $0x6a0] sm:$0xff]
    %v307 = vld [vmem:[#allocation5 + $0x6a8] sm:$0xff]
    %v308 = vld [vmem:[#allocation5 + $0x6b0] sm:$0xff]
    %v309 = vld [vmem:[#allocation5 + $0x6b8] sm:$0xff]
    %v310 = vld [vmem:[#allocation5 + $0x6c0] sm:$0xff]
    %v311 = vld [vmem:[#allocation5 + $0x6c8] sm:$0xff]
    %v312 = vld [vmem:[#allocation5 + $0x6d0] sm:$0xff]
    %v313 = vld [vmem:[#allocation5 + $0x6d8] sm:$0xff]
    %v314 = vld [vmem:[#allocation5 + $0x6e0] sm:$0xff]
    %v315 = vld [vmem:[#allocation5 + $0x6e8] sm:$0xff]
    %v316 = vld [vmem:[#allocation5 + $0x6f0] sm:$0xff]
    %v317 = vld [vmem:[#allocation5 + $0x6f8] sm:$0xff]
    %v318 = vld [vmem:[#allocation5 + $0x700] sm:$0xff]
    %v319 = vld [vmem:[#allocation5 + $0x708] sm:$0xff]
    %v320 = vld [vmem:[#allocation5 + $0x710] sm:$0xff]
    %v321 = vld [vmem:[#allocation5 + $0x718] sm:$0xff]
    %v322 = vld [vmem:[#allocation5 + $0x720] sm:$0xff]
    %v323 = vld [vmem:[#allocation5 + $0x728] sm:$0xff]
    %v324 = vld [vmem:[#allocation5 + $0x730] sm:$0xff]
    %v325 = vld [vmem:[#allocation5 + $0x738] sm:$0xff]
    %v326 = vld [vmem:[#allocation5 + $0x740] sm:$0xff]
    %v327 = vld [vmem:[#allocation5 + $0x748] sm:$0xff]
    %v328 = vld [vmem:[#allocation5 + $0x750] sm:$0xff]
    %v329 = vld [vmem:[#allocation5 + $0x758] sm:$0xff]
    %v330 = vld [vmem:[#allocation5 + $0x760] sm:$0xff]
    %v331 = vld [vmem:[#allocation5 + $0x768] sm:$0xff]
    %v332 = vld [vmem:[#allocation5 + $0x770] sm:$0xff]
    %v333 = vld [vmem:[#allocation5 + $0x778] sm:$0xff]
    %v334 = vld [vmem:[#allocation5 + $0x780] sm:$0xff]
    %v335 = vld [vmem:[#allocation5 + $0x788] sm:$0xff]
    %v336 = vld [vmem:[#allocation5 + $0x790] sm:$0xff]
    %v337 = vld [vmem:[#allocation5 + $0x798] sm:$0xff]
    %v338 = vld [vmem:[#allocation5 + $0x7a0] sm:$0xff]
    %v339 = vld [vmem:[#allocation5 + $0x7a8] sm:$0xff]
    %v340 = vld [vmem:[#allocation5 + $0x7b0] sm:$0xff]
    %v341 = vld [vmem:[#allocation5 + $0x7b8] sm:$0xff]
    %v342 = vld [vmem:[#allocation5 + $0x7c0] sm:$0xff]
    %v343 = vld [vmem:[#allocation5 + $0x7c8] sm:$0xff]
    %v344 = vld [vmem:[#allocation5 + $0x7d0] sm:$0xff]
    %v345 = vld [vmem:[#allocation5 + $0x7d8] sm:$0xff]
    %v346 = vld [vmem:[#allocation5 + $0x7e0] sm:$0xff]
    %v347 = vld [vmem:[#allocation5 + $0x7e8] sm:$0xff]
    %v348 = vld [vmem:[#allocation5 + $0x7f0] sm:$0xff]
    %v349 = vld [vmem:[#allocation5 + $0x7f8] sm:$0xff]
    %v350 = vld [vmem:[#allocation5 + $0x800] sm:$0xff]
    %v351 = vld [vmem:[#allocation5 + $0x808] sm:$0xff]
    %v352 = vld [vmem:[#allocation5 + $0x810] sm:$0xff]
    %v353 = vld [vmem:[#allocation5 + $0x818] sm:$0xff]
    %v354 = vld [vmem:[#allocation5 + $0x820] sm:$0xff]
    %v355 = vld [vmem:[#allocation5 + $0x828] sm:$0xff]
    %v356 = vld [vmem:[#allocation5 + $0x830] sm:$0xff]
    %v357 = vld [vmem:[#allocation5 + $0x838] sm:$0xff]
    %v358 = vld [vmem:[#allocation5 + $0x840] sm:$0xff]
    %v359 = vld [vmem:[#allocation5 + $0x848] sm:$0xff]
    %v360 = vld [vmem:[#allocation5 + $0x850] sm:$0xff]
    %v361 = vld [vmem:[#allocation5 + $0x858] sm:$0xff]
    %v362 = vld [vmem:[#allocation5 + $0x860] sm:$0xff]
    %v363 = vld [vmem:[#allocation5 + $0x868] sm:$0xff]
    %v364 = vld [vmem:[#allocation5 + $0x870] sm:$0xff]
    %v365 = vld [vmem:[#allocation5 + $0x878] sm:$0xff]
    %v366 = vld [vmem:[#allocation5 + $0x880] sm:$0xff]
    %v367 = vld [vmem:[#allocation5 + $0x888] sm:$0xff]
    %v368 = vld [vmem:[#allocation5 + $0x890] sm:$0xff]
    %v369 = vld [vmem:[#allocation5 + $0x898] sm:$0xff]
    %v370 = vld [vmem:[#allocation5 + $0x8a0] sm:$0xff]
    %v371 = vld [vmem:[#allocation5 + $0x8a8] sm:$0xff]
    %v372 = vld [vmem:[#allocation5 + $0x8b0] sm:$0xff]
    %v373 = vld [vmem:[#allocation5 + $0x8b8] sm:$0xff]
    %v374 = vld [vmem:[#allocation5 + $0x8c0] sm:$0xff]
    %v375 = vld [vmem:[#allocation5 + $0x8c8] sm:$0xff]
    %v376 = vld [vmem:[#allocation5 + $0x8d0] sm:$0xff]
    %v377 = vld [vmem:[#allocation5 + $0x8d8] sm:$0xff]
    %v378 = vld [vmem:[#allocation5 + $0x8e0] sm:$0xff]
    %v379 = vld [vmem:[#allocation5 + $0x8e8] sm:$0xff]
    %v380 = vld [vmem:[#allocation5 + $0x8f0] sm:$0xff]
    %v381 = vld [vmem:[#allocation5 + $0x8f8] sm:$0xff]
    %v382 = vld [vmem:[#allocation7] sm:$0x3f]
    %v384 = vlaneseq
    %v385 = vshrl.u32 %v384, 7
    %v386 = vsub.s32 0, %v385
    %v387 = vrot.slane %v382, %v386
    %v388 = vlaneseq
    %v389 = vshrl.u32 %v388, 7
    %v390 = vsub.s32 1, %v389
    %v391 = vrot.slane %v382, %v390
    %v392 = vlaneseq
    %v393 = vshrl.u32 %v392, 7
    %v394 = vsub.s32 2, %v393
    %v395 = vrot.slane %v382, %v394
    %v396 = vlaneseq
    %v397 = vshrl.u32 %v396, 7
    %v398 = vsub.s32 3, %v397
    %v399 = vrot.slane %v382, %v398
    %v400 = vlaneseq
    %v401 = vshrl.u32 %v400, 7
    %v402 = vsub.s32 4, %v401
    %v403 = vrot.slane %v382, %v402
    %v404 = vlaneseq
    %v405 = vshrl.u32 %v404, 7
    %v406 = vsub.s32 5, %v405
    %v407 = vrot.slane %v382, %v406
    %v420 = vunpack.c.l.b16 %v88
    %v421 = vunpack.c.h.b16 %v88
    %v422 = vunpack.c.l.b16 %v89
    %v423 = vunpack.c.h.b16 %v89
    %v424 = vunpack.c.l.b16 %v90
    %v425 = vunpack.c.h.b16 %v90
    %v426 = vunpack.c.l.b16 %v91
    %v427 = vunpack.c.h.b16 %v91
    %v428 = vunpack.c.l.b16 %v92
    %v429 = vunpack.c.h.b16 %v92
    %v430 = vunpack.c.l.b16 %v93
    %v431 = vunpack.c.h.b16 %v93
    %v432 = vpack.c.b16 %v426, %v420
    %v433 = vpack.c.b16 %v427, %v421
    %v434 = vpack.c.b16 %v428, %v422
    %v435 = vpack.c.b16 %v429, %v423
    %v436 = vpack.c.b16 %v430, %v424
    %v437 = vpack.c.b16 %v431, %v425
    %v732 = vunpack.c.l.b16 %v94
    %v733 = vunpack.c.h.b16 %v94
    %v734 = vunpack.c.l.b16 %v95
    %v735 = vunpack.c.h.b16 %v95
    %v736 = vunpack.c.l.b16 %v96
    %v737 = vunpack.c.h.b16 %v96
    %v738 = vunpack.c.l.b16 %v97
    %v739 = vunpack.c.h.b16 %v97
    %v740 = vunpack.c.l.b16 %v98
    %v741 = vunpack.c.h.b16 %v98
    %v742 = vunpack.c.l.b16 %v99
    %v743 = vunpack.c.h.b16 %v99
    %v744 = vunpack.c.l.b16 %v100
    %v745 = vunpack.c.h.b16 %v100
    %v746 = vunpack.c.l.b16 %v101
    %v747 = vunpack.c.h.b16 %v101
    %v748 = vunpack.c.l.b16 %v102
    %v749 = vunpack.c.h.b16 %v102
    %v750 = vunpack.c.l.b16 %v103
    %v751 = vunpack.c.h.b16 %v103
    %v752 = vunpack.c.l.b16 %v104
    %v753 = vunpack.c.h.b16 %v104
    %v754 = vunpack.c.l.b16 %v105
    %v755 = vunpack.c.h.b16 %v105
    %v756 = vunpack.c.l.b16 %v106
    %v757 = vunpack.c.h.b16 %v106
    %v758 = vunpack.c.l.b16 %v107
    %v759 = vunpack.c.h.b16 %v107
    %v760 = vunpack.c.l.b16 %v108
    %v761 = vunpack.c.h.b16 %v108
    %v762 = vunpack.c.l.b16 %v109
    %v763 = vunpack.c.h.b16 %v109
    %v764 = vunpack.c.l.b16 %v110
    %v765 = vunpack.c.h.b16 %v110
    %v766 = vunpack.c.l.b16 %v111
    %v767 = vunpack.c.h.b16 %v111
    %v768 = vunpack.c.l.b16 %v112
    %v769 = vunpack.c.h.b16 %v112
    %v770 = vunpack.c.l.b16 %v113
    %v771 = vunpack.c.h.b16 %v113
    %v772 = vunpack.c.l.b16 %v114
    %v773 = vunpack.c.h.b16 %v114
    %v774 = vunpack.c.l.b16 %v115
    %v775 = vunpack.c.h.b16 %v115
    %v776 = vunpack.c.l.b16 %v116
    %v777 = vunpack.c.h.b16 %v116
    %v778 = vunpack.c.l.b16 %v117
    %v779 = vunpack.c.h.b16 %v117
    %v780 = vunpack.c.l.b16 %v118
    %v781 = vunpack.c.h.b16 %v118
    %v782 = vunpack.c.l.b16 %v119
    %v783 = vunpack.c.h.b16 %v119
    %v784 = vunpack.c.l.b16 %v120
    %v785 = vunpack.c.h.b16 %v120
    %v786 = vunpack.c.l.b16 %v121
    %v787 = vunpack.c.h.b16 %v121
    %v788 = vunpack.c.l.b16 %v122
    %v789 = vunpack.c.h.b16 %v122
    %v790 = vunpack.c.l.b16 %v123
    %v791 = vunpack.c.h.b16 %v123
    %v792 = vunpack.c.l.b16 %v124
    %v793 = vunpack.c.h.b16 %v124
    %v794 = vunpack.c.l.b16 %v125
    %v795 = vunpack.c.h.b16 %v125
    %v796 = vunpack.c.l.b16 %v126
    %v797 = vunpack.c.h.b16 %v126
    %v798 = vunpack.c.l.b16 %v127
    %v799 = vunpack.c.h.b16 %v127
    %v800 = vunpack.c.l.b16 %v128
    %v801 = vunpack.c.h.b16 %v128
    %v802 = vunpack.c.l.b16 %v129
    %v803 = vunpack.c.h.b16 %v129
    %v804 = vunpack.c.l.b16 %v130
    %v805 = vunpack.c.h.b16 %v130
    %v806 = vunpack.c.l.b16 %v131
    %v807 = vunpack.c.h.b16 %v131
    %v808 = vunpack.c.l.b16 %v132
    %v809 = vunpack.c.h.b16 %v132
    %v810 = vunpack.c.l.b16 %v133
    %v811 = vunpack.c.h.b16 %v133
    %v812 = vunpack.c.l.b16 %v134
    %v813 = vunpack.c.h.b16 %v134
    %v814 = vunpack.c.l.b16 %v135
    %v815 = vunpack.c.h.b16 %v135
    %v816 = vunpack.c.l.b16 %v136
    %v817 = vunpack.c.h.b16 %v136
    %v818 = vunpack.c.l.b16 %v137
    %v819 = vunpack.c.h.b16 %v137
    %v820 = vunpack.c.l.b16 %v138
    %v821 = vunpack.c.h.b16 %v138
    %v822 = vunpack.c.l.b16 %v139
    %v823 = vunpack.c.h.b16 %v139
    %v824 = vunpack.c.l.b16 %v140
    %v825 = vunpack.c.h.b16 %v140
    %v826 = vunpack.c.l.b16 %v141
    %v827 = vunpack.c.h.b16 %v141
    %v828 = vunpack.c.l.b16 %v142
    %v829 = vunpack.c.h.b16 %v142
    %v830 = vunpack.c.l.b16 %v143
    %v831 = vunpack.c.h.b16 %v143
    %v832 = vunpack.c.l.b16 %v144
    %v833 = vunpack.c.h.b16 %v144
    %v834 = vunpack.c.l.b16 %v145
    %v835 = vunpack.c.h.b16 %v145
    %v836 = vunpack.c.l.b16 %v146
    %v837 = vunpack.c.h.b16 %v146
    %v838 = vunpack.c.l.b16 %v147
    %v839 = vunpack.c.h.b16 %v147
    %v840 = vunpack.c.l.b16 %v148
    %v841 = vunpack.c.h.b16 %v148
    %v842 = vunpack.c.l.b16 %v149
    %v843 = vunpack.c.h.b16 %v149
    %v844 = vunpack.c.l.b16 %v150
    %v845 = vunpack.c.h.b16 %v150
    %v846 = vunpack.c.l.b16 %v151
    %v847 = vunpack.c.h.b16 %v151
    %v848 = vunpack.c.l.b16 %v152
    %v849 = vunpack.c.h.b16 %v152
    %v850 = vunpack.c.l.b16 %v153
    %v851 = vunpack.c.h.b16 %v153
    %v852 = vunpack.c.l.b16 %v154
    %v853 = vunpack.c.h.b16 %v154
    %v854 = vunpack.c.l.b16 %v155
    %v855 = vunpack.c.h.b16 %v155
    %v856 = vunpack.c.l.b16 %v156
    %v857 = vunpack.c.h.b16 %v156
    %v858 = vunpack.c.l.b16 %v157
    %v859 = vunpack.c.h.b16 %v157
    %v860 = vunpack.c.l.b16 %v158
    %v861 = vunpack.c.h.b16 %v158
    %v862 = vunpack.c.l.b16 %v159
    %v863 = vunpack.c.h.b16 %v159
    %v864 = vunpack.c.l.b16 %v160
    %v865 = vunpack.c.h.b16 %v160
    %v866 = vunpack.c.l.b16 %v161
    %v867 = vunpack.c.h.b16 %v161
    %v868 = vunpack.c.l.b16 %v162
    %v869 = vunpack.c.h.b16 %v162
    %v870 = vunpack.c.l.b16 %v163
    %v871 = vunpack.c.h.b16 %v163
    %v872 = vunpack.c.l.b16 %v164
    %v873 = vunpack.c.h.b16 %v164
    %v874 = vunpack.c.l.b16 %v165
    %v875 = vunpack.c.h.b16 %v165
    %v876 = vunpack.c.l.b16 %v166
    %v877 = vunpack.c.h.b16 %v166
    %v878 = vunpack.c.l.b16 %v167
    %v879 = vunpack.c.h.b16 %v167
    %v880 = vunpack.c.l.b16 %v168
    %v881 = vunpack.c.h.b16 %v168
    %v882 = vunpack.c.l.b16 %v169
    %v883 = vunpack.c.h.b16 %v169
    %v884 = vunpack.c.l.b16 %v170
    %v885 = vunpack.c.h.b16 %v170
    %v886 = vunpack.c.l.b16 %v171
    %v887 = vunpack.c.h.b16 %v171
    %v888 = vunpack.c.l.b16 %v172
    %v889 = vunpack.c.h.b16 %v172
    %v890 = vunpack.c.l.b16 %v173
    %v891 = vunpack.c.h.b16 %v173
    %v892 = vunpack.c.l.b16 %v174
    %v893 = vunpack.c.h.b16 %v174
    %v894 = vunpack.c.l.b16 %v175
    %v895 = vunpack.c.h.b16 %v175
    %v896 = vunpack.c.l.b16 %v176
    %v897 = vunpack.c.h.b16 %v176
    %v898 = vunpack.c.l.b16 %v177
    %v899 = vunpack.c.h.b16 %v177
    %v900 = vunpack.c.l.b16 %v178
    %v901 = vunpack.c.h.b16 %v178
    %v902 = vunpack.c.l.b16 %v179
    %v903 = vunpack.c.h.b16 %v179
    %v904 = vunpack.c.l.b16 %v180
    %v905 = vunpack.c.h.b16 %v180
    %v906 = vunpack.c.l.b16 %v181
    %v907 = vunpack.c.h.b16 %v181
    %v908 = vunpack.c.l.b16 %v182
    %v909 = vunpack.c.h.b16 %v182
    %v910 = vunpack.c.l.b16 %v183
    %v911 = vunpack.c.h.b16 %v183
    %v912 = vunpack.c.l.b16 %v184
    %v913 = vunpack.c.h.b16 %v184
    %v914 = vunpack.c.l.b16 %v185
    %v915 = vunpack.c.h.b16 %v185
    %v916 = vunpack.c.l.b16 %v186
    %v917 = vunpack.c.h.b16 %v186
    %v918 = vunpack.c.l.b16 %v187
    %v919 = vunpack.c.h.b16 %v187
    %v920 = vunpack.c.l.b16 %v188
    %v921 = vunpack.c.h.b16 %v188
    %v922 = vunpack.c.l.b16 %v189
    %v923 = vunpack.c.h.b16 %v189
    %v924 = vunpack.c.l.b16 %v190
    %v925 = vunpack.c.h.b16 %v190
    %v926 = vunpack.c.l.b16 %v191
    %v927 = vunpack.c.h.b16 %v191
    %v928 = vunpack.c.l.b16 %v192
    %v929 = vunpack.c.h.b16 %v192
    %v930 = vunpack.c.l.b16 %v193
    %v931 = vunpack.c.h.b16 %v193
    %v932 = vunpack.c.l.b16 %v194
    %v933 = vunpack.c.h.b16 %v194
    %v934 = vunpack.c.l.b16 %v195
    %v935 = vunpack.c.h.b16 %v195
    %v936 = vunpack.c.l.b16 %v196
    %v937 = vunpack.c.h.b16 %v196
    %v938 = vunpack.c.l.b16 %v197
    %v939 = vunpack.c.h.b16 %v197
    %v940 = vunpack.c.l.b16 %v198
    %v941 = vunpack.c.h.b16 %v198
    %v942 = vunpack.c.l.b16 %v199
    %v943 = vunpack.c.h.b16 %v199
    %v944 = vunpack.c.l.b16 %v200
    %v945 = vunpack.c.h.b16 %v200
    %v946 = vunpack.c.l.b16 %v201
    %v947 = vunpack.c.h.b16 %v201
    %v948 = vunpack.c.l.b16 %v202
    %v949 = vunpack.c.h.b16 %v202
    %v950 = vunpack.c.l.b16 %v203
    %v951 = vunpack.c.h.b16 %v203
    %v952 = vunpack.c.l.b16 %v204
    %v953 = vunpack.c.h.b16 %v204
    %v954 = vunpack.c.l.b16 %v205
    %v955 = vunpack.c.h.b16 %v205
    %v956 = vunpack.c.l.b16 %v206
    %v957 = vunpack.c.h.b16 %v206
    %v958 = vunpack.c.l.b16 %v207
    %v959 = vunpack.c.h.b16 %v207
    %v960 = vunpack.c.l.b16 %v208
    %v961 = vunpack.c.h.b16 %v208
    %v962 = vunpack.c.l.b16 %v209
    %v963 = vunpack.c.h.b16 %v209
    %v964 = vunpack.c.l.b16 %v210
    %v965 = vunpack.c.h.b16 %v210
    %v966 = vunpack.c.l.b16 %v211
    %v967 = vunpack.c.h.b16 %v211
    %v968 = vunpack.c.l.b16 %v212
    %v969 = vunpack.c.h.b16 %v212
    %v970 = vunpack.c.l.b16 %v213
    %v971 = vunpack.c.h.b16 %v213
    %v972 = vunpack.c.l.b16 %v214
    %v973 = vunpack.c.h.b16 %v214
    %v974 = vunpack.c.l.b16 %v215
    %v975 = vunpack.c.h.b16 %v215
    %v976 = vunpack.c.l.b16 %v216
    %v977 = vunpack.c.h.b16 %v216
    %v978 = vunpack.c.l.b16 %v217
    %v979 = vunpack.c.h.b16 %v217
    %v980 = vunpack.c.l.b16 %v218
    %v981 = vunpack.c.h.b16 %v218
    %v982 = vunpack.c.l.b16 %v219
    %v983 = vunpack.c.h.b16 %v219
    %v984 = vunpack.c.l.b16 %v220
    %v985 = vunpack.c.h.b16 %v220
    %v986 = vunpack.c.l.b16 %v221
    %v987 = vunpack.c.h.b16 %v221
    %v988 = vunpack.c.l.b16 %v222
    %v989 = vunpack.c.h.b16 %v222
    %v990 = vunpack.c.l.b16 %v223
    %v991 = vunpack.c.h.b16 %v223
    %v992 = vunpack.c.l.b16 %v224
    %v993 = vunpack.c.h.b16 %v224
    %v994 = vunpack.c.l.b16 %v225
    %v995 = vunpack.c.h.b16 %v225
    %v996 = vunpack.c.l.b16 %v226
    %v997 = vunpack.c.h.b16 %v226
    %v998 = vunpack.c.l.b16 %v227
    %v999 = vunpack.c.h.b16 %v227
    %v1000 = vunpack.c.l.b16 %v228
    %v1001 = vunpack.c.h.b16 %v228
    %v1002 = vunpack.c.l.b16 %v229
    %v1003 = vunpack.c.h.b16 %v229
    %v1004 = vunpack.c.l.b16 %v230
    %v1005 = vunpack.c.h.b16 %v230
    %v1006 = vunpack.c.l.b16 %v231
    %v1007 = vunpack.c.h.b16 %v231
    %v1008 = vunpack.c.l.b16 %v232
    %v1009 = vunpack.c.h.b16 %v232
    %v1010 = vunpack.c.l.b16 %v233
    %v1011 = vunpack.c.h.b16 %v233
    %v1012 = vunpack.c.l.b16 %v234
    %v1013 = vunpack.c.h.b16 %v234
    %v1014 = vunpack.c.l.b16 %v235
    %v1015 = vunpack.c.h.b16 %v235
    %v1016 = vunpack.c.l.b16 %v236
    %v1017 = vunpack.c.h.b16 %v236
    %v1018 = vunpack.c.l.b16 %v237
    %v1019 = vunpack.c.h.b16 %v237
    %v1020 = vunpack.c.l.b16 %v238
    %v1021 = vunpack.c.h.b16 %v238
    %v1022 = vunpack.c.l.b16 %v239
    %v1023 = vunpack.c.h.b16 %v239
    %v1024 = vunpack.c.l.b16 %v240
    %v1025 = vunpack.c.h.b16 %v240
    %v1026 = vunpack.c.l.b16 %v241
    %v1027 = vunpack.c.h.b16 %v241
    %v1028 = vunpack.c.l.b16 %v242
    %v1029 = vunpack.c.h.b16 %v242
    %v1030 = vunpack.c.l.b16 %v243
    %v1031 = vunpack.c.h.b16 %v243
    %v1032 = vunpack.c.l.b16 %v244
    %v1033 = vunpack.c.h.b16 %v244
    %v1034 = vunpack.c.l.b16 %v245
    %v1035 = vunpack.c.h.b16 %v245
    %v1036 = vunpack.c.l.b16 %v246
    %v1037 = vunpack.c.h.b16 %v246
    %v1038 = vunpack.c.l.b16 %v247
    %v1039 = vunpack.c.h.b16 %v247
    %v1040 = vunpack.c.l.b16 %v248
    %v1041 = vunpack.c.h.b16 %v248
    %v1042 = vunpack.c.l.b16 %v249
    %v1043 = vunpack.c.h.b16 %v249
    %v1044 = vunpack.c.l.b16 %v250
    %v1045 = vunpack.c.h.b16 %v250
    %v1046 = vunpack.c.l.b16 %v251
    %v1047 = vunpack.c.h.b16 %v251
    %v1048 = vunpack.c.l.b16 %v252
    %v1049 = vunpack.c.h.b16 %v252
    %v1050 = vunpack.c.l.b16 %v253
    %v1051 = vunpack.c.h.b16 %v253
    %v1052 = vunpack.c.l.b16 %v254
    %v1053 = vunpack.c.h.b16 %v254
    %v1054 = vunpack.c.l.b16 %v255
    %v1055 = vunpack.c.h.b16 %v255
    %v1056 = vunpack.c.l.b16 %v256
    %v1057 = vunpack.c.h.b16 %v256
    %v1058 = vunpack.c.l.b16 %v257
    %v1059 = vunpack.c.h.b16 %v257
    %v1060 = vunpack.c.l.b16 %v258
    %v1061 = vunpack.c.h.b16 %v258
    %v1062 = vunpack.c.l.b16 %v259
    %v1063 = vunpack.c.h.b16 %v259
    %v1064 = vunpack.c.l.b16 %v260
    %v1065 = vunpack.c.h.b16 %v260
    %v1066 = vunpack.c.l.b16 %v261
    %v1067 = vunpack.c.h.b16 %v261
    %v1068 = vunpack.c.l.b16 %v262
    %v1069 = vunpack.c.h.b16 %v262
    %v1070 = vunpack.c.l.b16 %v263
    %v1071 = vunpack.c.h.b16 %v263
    %v1072 = vunpack.c.l.b16 %v264
    %v1073 = vunpack.c.h.b16 %v264
    %v1074 = vunpack.c.l.b16 %v265
    %v1075 = vunpack.c.h.b16 %v265
    %v1076 = vunpack.c.l.b16 %v266
    %v1077 = vunpack.c.h.b16 %v266
    %v1078 = vunpack.c.l.b16 %v267
    %v1079 = vunpack.c.h.b16 %v267
    %v1080 = vunpack.c.l.b16 %v268
    %v1081 = vunpack.c.h.b16 %v268
    %v1082 = vunpack.c.l.b16 %v269
    %v1083 = vunpack.c.h.b16 %v269
    %v1084 = vunpack.c.l.b16 %v270
    %v1085 = vunpack.c.h.b16 %v270
    %v1086 = vunpack.c.l.b16 %v271
    %v1087 = vunpack.c.h.b16 %v271
    %v1088 = vunpack.c.l.b16 %v272
    %v1089 = vunpack.c.h.b16 %v272
    %v1090 = vunpack.c.l.b16 %v273
    %v1091 = vunpack.c.h.b16 %v273
    %v1092 = vunpack.c.l.b16 %v274
    %v1093 = vunpack.c.h.b16 %v274
    %v1094 = vunpack.c.l.b16 %v275
    %v1095 = vunpack.c.h.b16 %v275
    %v1096 = vunpack.c.l.b16 %v276
    %v1097 = vunpack.c.h.b16 %v276
    %v1098 = vunpack.c.l.b16 %v277
    %v1099 = vunpack.c.h.b16 %v277
    %v1100 = vunpack.c.l.b16 %v278
    %v1101 = vunpack.c.h.b16 %v278
    %v1102 = vunpack.c.l.b16 %v279
    %v1103 = vunpack.c.h.b16 %v279
    %v1104 = vunpack.c.l.b16 %v280
    %v1105 = vunpack.c.h.b16 %v280
    %v1106 = vunpack.c.l.b16 %v281
    %v1107 = vunpack.c.h.b16 %v281
    %v1108 = vunpack.c.l.b16 %v282
    %v1109 = vunpack.c.h.b16 %v282
    %v1110 = vunpack.c.l.b16 %v283
    %v1111 = vunpack.c.h.b16 %v283
    %v1112 = vunpack.c.l.b16 %v284
    %v1113 = vunpack.c.h.b16 %v284
    %v1114 = vunpack.c.l.b16 %v285
    %v1115 = vunpack.c.h.b16 %v285
    %v1116 = vunpack.c.l.b16 %v286
    %v1117 = vunpack.c.h.b16 %v286
    %v1118 = vunpack.c.l.b16 %v287
    %v1119 = vunpack.c.h.b16 %v287
    %v1120 = vunpack.c.l.b16 %v288
    %v1121 = vunpack.c.h.b16 %v288
    %v1122 = vunpack.c.l.b16 %v289
    %v1123 = vunpack.c.h.b16 %v289
    %v1124 = vunpack.c.l.b16 %v290
    %v1125 = vunpack.c.h.b16 %v290
    %v1126 = vunpack.c.l.b16 %v291
    %v1127 = vunpack.c.h.b16 %v291
    %v1128 = vunpack.c.l.b16 %v292
    %v1129 = vunpack.c.h.b16 %v292
    %v1130 = vunpack.c.l.b16 %v293
    %v1131 = vunpack.c.h.b16 %v293
    %v1132 = vunpack.c.l.b16 %v294
    %v1133 = vunpack.c.h.b16 %v294
    %v1134 = vunpack.c.l.b16 %v295
    %v1135 = vunpack.c.h.b16 %v295
    %v1136 = vunpack.c.l.b16 %v296
    %v1137 = vunpack.c.h.b16 %v296
    %v1138 = vunpack.c.l.b16 %v297
    %v1139 = vunpack.c.h.b16 %v297
    %v1140 = vunpack.c.l.b16 %v298
    %v1141 = vunpack.c.h.b16 %v298
    %v1142 = vunpack.c.l.b16 %v299
    %v1143 = vunpack.c.h.b16 %v299
    %v1144 = vunpack.c.l.b16 %v300
    %v1145 = vunpack.c.h.b16 %v300
    %v1146 = vunpack.c.l.b16 %v301
    %v1147 = vunpack.c.h.b16 %v301
    %v1148 = vunpack.c.l.b16 %v302
    %v1149 = vunpack.c.h.b16 %v302
    %v1150 = vunpack.c.l.b16 %v303
    %v1151 = vunpack.c.h.b16 %v303
    %v1152 = vunpack.c.l.b16 %v304
    %v1153 = vunpack.c.h.b16 %v304
    %v1154 = vunpack.c.l.b16 %v305
    %v1155 = vunpack.c.h.b16 %v305
    %v1156 = vunpack.c.l.b16 %v306
    %v1157 = vunpack.c.h.b16 %v306
    %v1158 = vunpack.c.l.b16 %v307
    %v1159 = vunpack.c.h.b16 %v307
    %v1160 = vunpack.c.l.b16 %v308
    %v1161 = vunpack.c.h.b16 %v308
    %v1162 = vunpack.c.l.b16 %v309
    %v1163 = vunpack.c.h.b16 %v309
    %v1164 = vunpack.c.l.b16 %v310
    %v1165 = vunpack.c.h.b16 %v310
    %v1166 = vunpack.c.l.b16 %v311
    %v1167 = vunpack.c.h.b16 %v311
    %v1168 = vunpack.c.l.b16 %v312
    %v1169 = vunpack.c.h.b16 %v312
    %v1170 = vunpack.c.l.b16 %v313
    %v1171 = vunpack.c.h.b16 %v313
    %v1172 = vunpack.c.l.b16 %v314
    %v1173 = vunpack.c.h.b16 %v314
    %v1174 = vunpack.c.l.b16 %v315
    %v1175 = vunpack.c.h.b16 %v315
    %v1176 = vunpack.c.l.b16 %v316
    %v1177 = vunpack.c.h.b16 %v316
    %v1178 = vunpack.c.l.b16 %v317
    %v1179 = vunpack.c.h.b16 %v317
    %v1180 = vunpack.c.l.b16 %v318
    %v1181 = vunpack.c.h.b16 %v318
    %v1182 = vunpack.c.l.b16 %v319
    %v1183 = vunpack.c.h.b16 %v319
    %v1184 = vunpack.c.l.b16 %v320
    %v1185 = vunpack.c.h.b16 %v320
    %v1186 = vunpack.c.l.b16 %v321
    %v1187 = vunpack.c.h.b16 %v321
    %v1188 = vunpack.c.l.b16 %v322
    %v1189 = vunpack.c.h.b16 %v322
    %v1190 = vunpack.c.l.b16 %v323
    %v1191 = vunpack.c.h.b16 %v323
    %v1192 = vunpack.c.l.b16 %v324
    %v1193 = vunpack.c.h.b16 %v324
    %v1194 = vunpack.c.l.b16 %v325
    %v1195 = vunpack.c.h.b16 %v325
    %v1196 = vunpack.c.l.b16 %v326
    %v1197 = vunpack.c.h.b16 %v326
    %v1198 = vunpack.c.l.b16 %v327
    %v1199 = vunpack.c.h.b16 %v327
    %v1200 = vunpack.c.l.b16 %v328
    %v1201 = vunpack.c.h.b16 %v328
    %v1202 = vunpack.c.l.b16 %v329
    %v1203 = vunpack.c.h.b16 %v329
    %v1204 = vunpack.c.l.b16 %v330
    %v1205 = vunpack.c.h.b16 %v330
    %v1206 = vunpack.c.l.b16 %v331
    %v1207 = vunpack.c.h.b16 %v331
    %v1208 = vunpack.c.l.b16 %v332
    %v1209 = vunpack.c.h.b16 %v332
    %v1210 = vunpack.c.l.b16 %v333
    %v1211 = vunpack.c.h.b16 %v333
    %v1212 = vunpack.c.l.b16 %v334
    %v1213 = vunpack.c.h.b16 %v334
    %v1214 = vunpack.c.l.b16 %v335
    %v1215 = vunpack.c.h.b16 %v335
    %v1216 = vunpack.c.l.b16 %v336
    %v1217 = vunpack.c.h.b16 %v336
    %v1218 = vunpack.c.l.b16 %v337
    %v1219 = vunpack.c.h.b16 %v337
    %v1220 = vunpack.c.l.b16 %v338
    %v1221 = vunpack.c.h.b16 %v338
    %v1222 = vunpack.c.l.b16 %v339
    %v1223 = vunpack.c.h.b16 %v339
    %v1224 = vunpack.c.l.b16 %v340
    %v1225 = vunpack.c.h.b16 %v340
    %v1226 = vunpack.c.l.b16 %v341
    %v1227 = vunpack.c.h.b16 %v341
    %v1228 = vunpack.c.l.b16 %v342
    %v1229 = vunpack.c.h.b16 %v342
    %v1230 = vunpack.c.l.b16 %v343
    %v1231 = vunpack.c.h.b16 %v343
    %v1232 = vunpack.c.l.b16 %v344
    %v1233 = vunpack.c.h.b16 %v344
    %v1234 = vunpack.c.l.b16 %v345
    %v1235 = vunpack.c.h.b16 %v345
    %v1236 = vunpack.c.l.b16 %v346
    %v1237 = vunpack.c.h.b16 %v346
    %v1238 = vunpack.c.l.b16 %v347
    %v1239 = vunpack.c.h.b16 %v347
    %v1240 = vunpack.c.l.b16 %v348
    %v1241 = vunpack.c.h.b16 %v348
    %v1242 = vunpack.c.l.b16 %v349
    %v1243 = vunpack.c.h.b16 %v349
    %v1244 = vunpack.c.l.b16 %v350
    %v1245 = vunpack.c.h.b16 %v350
    %v1246 = vunpack.c.l.b16 %v351
    %v1247 = vunpack.c.h.b16 %v351
    %v1248 = vunpack.c.l.b16 %v352
    %v1249 = vunpack.c.h.b16 %v352
    %v1250 = vunpack.c.l.b16 %v353
    %v1251 = vunpack.c.h.b16 %v353
    %v1252 = vunpack.c.l.b16 %v354
    %v1253 = vunpack.c.h.b16 %v354
    %v1254 = vunpack.c.l.b16 %v355
    %v1255 = vunpack.c.h.b16 %v355
    %v1256 = vunpack.c.l.b16 %v356
    %v1257 = vunpack.c.h.b16 %v356
    %v1258 = vunpack.c.l.b16 %v357
    %v1259 = vunpack.c.h.b16 %v357
    %v1260 = vunpack.c.l.b16 %v358
    %v1261 = vunpack.c.h.b16 %v358
    %v1262 = vunpack.c.l.b16 %v359
    %v1263 = vunpack.c.h.b16 %v359
    %v1264 = vunpack.c.l.b16 %v360
    %v1265 = vunpack.c.h.b16 %v360
    %v1266 = vunpack.c.l.b16 %v361
    %v1267 = vunpack.c.h.b16 %v361
    %v1268 = vunpack.c.l.b16 %v362
    %v1269 = vunpack.c.h.b16 %v362
    %v1270 = vunpack.c.l.b16 %v363
    %v1271 = vunpack.c.h.b16 %v363
    %v1272 = vunpack.c.l.b16 %v364
    %v1273 = vunpack.c.h.b16 %v364
    %v1274 = vunpack.c.l.b16 %v365
    %v1275 = vunpack.c.h.b16 %v365
    %v1276 = vunpack.c.l.b16 %v366
    %v1277 = vunpack.c.h.b16 %v366
    %v1278 = vunpack.c.l.b16 %v367
    %v1279 = vunpack.c.h.b16 %v367
    %v1280 = vunpack.c.l.b16 %v368
    %v1281 = vunpack.c.h.b16 %v368
    %v1282 = vunpack.c.l.b16 %v369
    %v1283 = vunpack.c.h.b16 %v369
    %v1284 = vunpack.c.l.b16 %v370
    %v1285 = vunpack.c.h.b16 %v370
    %v1286 = vunpack.c.l.b16 %v371
    %v1287 = vunpack.c.h.b16 %v371
    %v1288 = vunpack.c.l.b16 %v372
    %v1289 = vunpack.c.h.b16 %v372
    %v1290 = vunpack.c.l.b16 %v373
    %v1291 = vunpack.c.h.b16 %v373
    %v1292 = vunpack.c.l.b16 %v374
    %v1293 = vunpack.c.h.b16 %v374
    %v1294 = vunpack.c.l.b16 %v375
    %v1295 = vunpack.c.h.b16 %v375
    %v1296 = vunpack.c.l.b16 %v376
    %v1297 = vunpack.c.h.b16 %v376
    %v1298 = vunpack.c.l.b16 %v377
    %v1299 = vunpack.c.h.b16 %v377
    %v1300 = vunpack.c.l.b16 %v378
    %v1301 = vunpack.c.h.b16 %v378
    %v1302 = vunpack.c.l.b16 %v379
    %v1303 = vunpack.c.h.b16 %v379
    %v1304 = vunpack.c.l.b16 %v380
    %v1305 = vunpack.c.h.b16 %v380
    %v1306 = vunpack.c.l.b16 %v381
    %v1307 = vunpack.c.h.b16 %v381
    %v1308 = vpack.c.b16 %v738, %v732
    %v1309 = vpack.c.b16 %v739, %v733
    %v1310 = vpack.c.b16 %v740, %v734
    %v1311 = vpack.c.b16 %v741, %v735
    %v1312 = vpack.c.b16 %v742, %v736
    %v1313 = vpack.c.b16 %v743, %v737
    %v1314 = vpack.c.b16 %v750, %v744
    %v1315 = vpack.c.b16 %v751, %v745
    %v1316 = vpack.c.b16 %v752, %v746
    %v1317 = vpack.c.b16 %v753, %v747
    %v1318 = vpack.c.b16 %v754, %v748
    %v1319 = vpack.c.b16 %v755, %v749
    %v1320 = vpack.c.b16 %v762, %v756
    %v1321 = vpack.c.b16 %v763, %v757
    %v1322 = vpack.c.b16 %v764, %v758
    %v1323 = vpack.c.b16 %v765, %v759
    %v1324 = vpack.c.b16 %v766, %v760
    %v1325 = vpack.c.b16 %v767, %v761
    %v1326 = vpack.c.b16 %v774, %v768
    %v1327 = vpack.c.b16 %v775, %v769
    %v1328 = vpack.c.b16 %v776, %v770
    %v1329 = vpack.c.b16 %v777, %v771
    %v1330 = vpack.c.b16 %v778, %v772
    %v1331 = vpack.c.b16 %v779, %v773
    %v1332 = vpack.c.b16 %v786, %v780
    %v1333 = vpack.c.b16 %v787, %v781
    %v1334 = vpack.c.b16 %v788, %v782
    %v1335 = vpack.c.b16 %v789, %v783
    %v1336 = vpack.c.b16 %v790, %v784
    %v1337 = vpack.c.b16 %v791, %v785
    %v1338 = vpack.c.b16 %v798, %v792
    %v1339 = vpack.c.b16 %v799, %v793
    %v1340 = vpack.c.b16 %v800, %v794
    %v1341 = vpack.c.b16 %v801, %v795
    %v1342 = vpack.c.b16 %v802, %v796
    %v1343 = vpack.c.b16 %v803, %v797
    %v1344 = vpack.c.b16 %v810, %v804
    %v1345 = vpack.c.b16 %v811, %v805
    %v1346 = vpack.c.b16 %v812, %v806
    %v1347 = vpack.c.b16 %v813, %v807
    %v1348 = vpack.c.b16 %v814, %v808
    %v1349 = vpack.c.b16 %v815, %v809
    %v1350 = vpack.c.b16 %v822, %v816
    %v1351 = vpack.c.b16 %v823, %v817
    %v1352 = vpack.c.b16 %v824, %v818
    %v1353 = vpack.c.b16 %v825, %v819
    %v1354 = vpack.c.b16 %v826, %v820
    %v1355 = vpack.c.b16 %v827, %v821
    %v1356 = vpack.c.b16 %v834, %v828
    %v1357 = vpack.c.b16 %v835, %v829
    %v1358 = vpack.c.b16 %v836, %v830
    %v1359 = vpack.c.b16 %v837, %v831
    %v1360 = vpack.c.b16 %v838, %v832
    %v1361 = vpack.c.b16 %v839, %v833
    %v1362 = vpack.c.b16 %v846, %v840
    %v1363 = vpack.c.b16 %v847, %v841
    %v1364 = vpack.c.b16 %v848, %v842
    %v1365 = vpack.c.b16 %v849, %v843
    %v1366 = vpack.c.b16 %v850, %v844
    %v1367 = vpack.c.b16 %v851, %v845
    %v1368 = vpack.c.b16 %v858, %v852
    %v1369 = vpack.c.b16 %v859, %v853
    %v1370 = vpack.c.b16 %v860, %v854
    %v1371 = vpack.c.b16 %v861, %v855
    %v1372 = vpack.c.b16 %v862, %v856
    %v1373 = vpack.c.b16 %v863, %v857
    %v1374 = vpack.c.b16 %v870, %v864
    %v1375 = vpack.c.b16 %v871, %v865
    %v1376 = vpack.c.b16 %v872, %v866
    %v1377 = vpack.c.b16 %v873, %v867
    %v1378 = vpack.c.b16 %v874, %v868
    %v1379 = vpack.c.b16 %v875, %v869
    %v1380 = vpack.c.b16 %v882, %v876
    %v1381 = vpack.c.b16 %v883, %v877
    %v1382 = vpack.c.b16 %v884, %v878
    %v1383 = vpack.c.b16 %v885, %v879
    %v1384 = vpack.c.b16 %v886, %v880
    %v1385 = vpack.c.b16 %v887, %v881
    %v1386 = vpack.c.b16 %v894, %v888
    %v1387 = vpack.c.b16 %v895, %v889
    %v1388 = vpack.c.b16 %v896, %v890
    %v1389 = vpack.c.b16 %v897, %v891
    %v1390 = vpack.c.b16 %v898, %v892
    %v1391 = vpack.c.b16 %v899, %v893
    %v1392 = vpack.c.b16 %v906, %v900
    %v1393 = vpack.c.b16 %v907, %v901
    %v1394 = vpack.c.b16 %v908, %v902
    %v1395 = vpack.c.b16 %v909, %v903
    %v1396 = vpack.c.b16 %v910, %v904
    %v1397 = vpack.c.b16 %v911, %v905
    %v1398 = vpack.c.b16 %v918, %v912
    %v1399 = vpack.c.b16 %v919, %v913
    %v1400 = vpack.c.b16 %v920, %v914
    %v1401 = vpack.c.b16 %v921, %v915
    %v1402 = vpack.c.b16 %v922, %v916
    %v1403 = vpack.c.b16 %v923, %v917
    %v1404 = vpack.c.b16 %v930, %v924
    %v1405 = vpack.c.b16 %v931, %v925
    %v1406 = vpack.c.b16 %v932, %v926
    %v1407 = vpack.c.b16 %v933, %v927
    %v1408 = vpack.c.b16 %v934, %v928
    %v1409 = vpack.c.b16 %v935, %v929
    %v1410 = vpack.c.b16 %v942, %v936
    %v1411 = vpack.c.b16 %v943, %v937
    %v1412 = vpack.c.b16 %v944, %v938
    %v1413 = vpack.c.b16 %v945, %v939
    %v1414 = vpack.c.b16 %v946, %v940
    %v1415 = vpack.c.b16 %v947, %v941
    %v1416 = vpack.c.b16 %v954, %v948
    %v1417 = vpack.c.b16 %v955, %v949
    %v1418 = vpack.c.b16 %v956, %v950
    %v1419 = vpack.c.b16 %v957, %v951
    %v1420 = vpack.c.b16 %v958, %v952
    %v1421 = vpack.c.b16 %v959, %v953
    %v1422 = vpack.c.b16 %v966, %v960
    %v1423 = vpack.c.b16 %v967, %v961
    %v1424 = vpack.c.b16 %v968, %v962
    %v1425 = vpack.c.b16 %v969, %v963
    %v1426 = vpack.c.b16 %v970, %v964
    %v1427 = vpack.c.b16 %v971, %v965
    %v1428 = vpack.c.b16 %v978, %v972
    %v1429 = vpack.c.b16 %v979, %v973
    %v1430 = vpack.c.b16 %v980, %v974
    %v1431 = vpack.c.b16 %v981, %v975
    %v1432 = vpack.c.b16 %v982, %v976
    %v1433 = vpack.c.b16 %v983, %v977
    %v1434 = vpack.c.b16 %v990, %v984
    %v1435 = vpack.c.b16 %v991, %v985
    %v1436 = vpack.c.b16 %v992, %v986
    %v1437 = vpack.c.b16 %v993, %v987
    %v1438 = vpack.c.b16 %v994, %v988
    %v1439 = vpack.c.b16 %v995, %v989
    %v1440 = vpack.c.b16 %v1002, %v996
    %v1441 = vpack.c.b16 %v1003, %v997
    %v1442 = vpack.c.b16 %v1004, %v998
    %v1443 = vpack.c.b16 %v1005, %v999
    %v1444 = vpack.c.b16 %v1006, %v1000
    %v1445 = vpack.c.b16 %v1007, %v1001
    %v1446 = vpack.c.b16 %v1014, %v1008
    %v1447 = vpack.c.b16 %v1015, %v1009
    %v1448 = vpack.c.b16 %v1016, %v1010
    %v1449 = vpack.c.b16 %v1017, %v1011
    %v1450 = vpack.c.b16 %v1018, %v1012
    %v1451 = vpack.c.b16 %v1019, %v1013
    %v1452 = vpack.c.b16 %v1026, %v1020
    %v1453 = vpack.c.b16 %v1027, %v1021
    %v1454 = vpack.c.b16 %v1028, %v1022
    %v1455 = vpack.c.b16 %v1029, %v1023
    %v1456 = vpack.c.b16 %v1030, %v1024
    %v1457 = vpack.c.b16 %v1031, %v1025
    %v1458 = vpack.c.b16 %v1038, %v1032
    %v1459 = vpack.c.b16 %v1039, %v1033
    %v1460 = vpack.c.b16 %v1040, %v1034
    %v1461 = vpack.c.b16 %v1041, %v1035
    %v1462 = vpack.c.b16 %v1042, %v1036
    %v1463 = vpack.c.b16 %v1043, %v1037
    %v1464 = vpack.c.b16 %v1050, %v1044
    %v1465 = vpack.c.b16 %v1051, %v1045
    %v1466 = vpack.c.b16 %v1052, %v1046
    %v1467 = vpack.c.b16 %v1053, %v1047
    %v1468 = vpack.c.b16 %v1054, %v1048
    %v1469 = vpack.c.b16 %v1055, %v1049
    %v1470 = vpack.c.b16 %v1062, %v1056
    %v1471 = vpack.c.b16 %v1063, %v1057
    %v1472 = vpack.c.b16 %v1064, %v1058
    %v1473 = vpack.c.b16 %v1065, %v1059
    %v1474 = vpack.c.b16 %v1066, %v1060
    %v1475 = vpack.c.b16 %v1067, %v1061
    %v1476 = vpack.c.b16 %v1074, %v1068
    %v1477 = vpack.c.b16 %v1075, %v1069
    %v1478 = vpack.c.b16 %v1076, %v1070
    %v1479 = vpack.c.b16 %v1077, %v1071
    %v1480 = vpack.c.b16 %v1078, %v1072
    %v1481 = vpack.c.b16 %v1079, %v1073
    %v1482 = vpack.c.b16 %v1086, %v1080
    %v1483 = vpack.c.b16 %v1087, %v1081
    %v1484 = vpack.c.b16 %v1088, %v1082
    %v1485 = vpack.c.b16 %v1089, %v1083
    %v1486 = vpack.c.b16 %v1090, %v1084
    %v1487 = vpack.c.b16 %v1091, %v1085
    %v1488 = vpack.c.b16 %v1098, %v1092
    %v1489 = vpack.c.b16 %v1099, %v1093
    %v1490 = vpack.c.b16 %v1100, %v1094
    %v1491 = vpack.c.b16 %v1101, %v1095
    %v1492 = vpack.c.b16 %v1102, %v1096
    %v1493 = vpack.c.b16 %v1103, %v1097
    %v1494 = vpack.c.b16 %v1110, %v1104
    %v1495 = vpack.c.b16 %v1111, %v1105
    %v1496 = vpack.c.b16 %v1112, %v1106
    %v1497 = vpack.c.b16 %v1113, %v1107
    %v1498 = vpack.c.b16 %v1114, %v1108
    %v1499 = vpack.c.b16 %v1115, %v1109
    %v1500 = vpack.c.b16 %v1122, %v1116
    %v1501 = vpack.c.b16 %v1123, %v1117
    %v1502 = vpack.c.b16 %v1124, %v1118
    %v1503 = vpack.c.b16 %v1125, %v1119
    %v1504 = vpack.c.b16 %v1126, %v1120
    %v1505 = vpack.c.b16 %v1127, %v1121
    %v1506 = vpack.c.b16 %v1134, %v1128
    %v1507 = vpack.c.b16 %v1135, %v1129
    %v1508 = vpack.c.b16 %v1136, %v1130
    %v1509 = vpack.c.b16 %v1137, %v1131
    %v1510 = vpack.c.b16 %v1138, %v1132
    %v1511 = vpack.c.b16 %v1139, %v1133
    %v1512 = vpack.c.b16 %v1146, %v1140
    %v1513 = vpack.c.b16 %v1147, %v1141
    %v1514 = vpack.c.b16 %v1148, %v1142
    %v1515 = vpack.c.b16 %v1149, %v1143
    %v1516 = vpack.c.b16 %v1150, %v1144
    %v1517 = vpack.c.b16 %v1151, %v1145
    %v1518 = vpack.c.b16 %v1158, %v1152
    %v1519 = vpack.c.b16 %v1159, %v1153
    %v1520 = vpack.c.b16 %v1160, %v1154
    %v1521 = vpack.c.b16 %v1161, %v1155
    %v1522 = vpack.c.b16 %v1162, %v1156
    %v1523 = vpack.c.b16 %v1163, %v1157
    %v1524 = vpack.c.b16 %v1170, %v1164
    %v1525 = vpack.c.b16 %v1171, %v1165
    %v1526 = vpack.c.b16 %v1172, %v1166
    %v1527 = vpack.c.b16 %v1173, %v1167
    %v1528 = vpack.c.b16 %v1174, %v1168
    %v1529 = vpack.c.b16 %v1175, %v1169
    %v1530 = vpack.c.b16 %v1182, %v1176
    %v1531 = vpack.c.b16 %v1183, %v1177
    %v1532 = vpack.c.b16 %v1184, %v1178
    %v1533 = vpack.c.b16 %v1185, %v1179
    %v1534 = vpack.c.b16 %v1186, %v1180
    %v1535 = vpack.c.b16 %v1187, %v1181
    %v1536 = vpack.c.b16 %v1194, %v1188
    %v1537 = vpack.c.b16 %v1195, %v1189
    %v1538 = vpack.c.b16 %v1196, %v1190
    %v1539 = vpack.c.b16 %v1197, %v1191
    %v1540 = vpack.c.b16 %v1198, %v1192
    %v1541 = vpack.c.b16 %v1199, %v1193
    %v1542 = vpack.c.b16 %v1206, %v1200
    %v1543 = vpack.c.b16 %v1207, %v1201
    %v1544 = vpack.c.b16 %v1208, %v1202
    %v1545 = vpack.c.b16 %v1209, %v1203
    %v1546 = vpack.c.b16 %v1210, %v1204
    %v1547 = vpack.c.b16 %v1211, %v1205
    %v1548 = vpack.c.b16 %v1218, %v1212
    %v1549 = vpack.c.b16 %v1219, %v1213
    %v1550 = vpack.c.b16 %v1220, %v1214
    %v1551 = vpack.c.b16 %v1221, %v1215
    %v1552 = vpack.c.b16 %v1222, %v1216
    %v1553 = vpack.c.b16 %v1223, %v1217
    %v1554 = vpack.c.b16 %v1230, %v1224
    %v1555 = vpack.c.b16 %v1231, %v1225
    %v1556 = vpack.c.b16 %v1232, %v1226
    %v1557 = vpack.c.b16 %v1233, %v1227
    %v1558 = vpack.c.b16 %v1234, %v1228
    %v1559 = vpack.c.b16 %v1235, %v1229
    %v1560 = vpack.c.b16 %v1242, %v1236
    %v1561 = vpack.c.b16 %v1243, %v1237
    %v1562 = vpack.c.b16 %v1244, %v1238
    %v1563 = vpack.c.b16 %v1245, %v1239
    %v1564 = vpack.c.b16 %v1246, %v1240
    %v1565 = vpack.c.b16 %v1247, %v1241
    %v1566 = vpack.c.b16 %v1254, %v1248
    %v1567 = vpack.c.b16 %v1255, %v1249
    %v1568 = vpack.c.b16 %v1256, %v1250
    %v1569 = vpack.c.b16 %v1257, %v1251
    %v1570 = vpack.c.b16 %v1258, %v1252
    %v1571 = vpack.c.b16 %v1259, %v1253
    %v1572 = vpack.c.b16 %v1266, %v1260
    %v1573 = vpack.c.b16 %v1267, %v1261
    %v1574 = vpack.c.b16 %v1268, %v1262
    %v1575 = vpack.c.b16 %v1269, %v1263
    %v1576 = vpack.c.b16 %v1270, %v1264
    %v1577 = vpack.c.b16 %v1271, %v1265
    %v1578 = vpack.c.b16 %v1278, %v1272
    %v1579 = vpack.c.b16 %v1279, %v1273
    %v1580 = vpack.c.b16 %v1280, %v1274
    %v1581 = vpack.c.b16 %v1281, %v1275
    %v1582 = vpack.c.b16 %v1282, %v1276
    %v1583 = vpack.c.b16 %v1283, %v1277
    %v1584 = vpack.c.b16 %v1290, %v1284
    %v1585 = vpack.c.b16 %v1291, %v1285
    %v1586 = vpack.c.b16 %v1292, %v1286
    %v1587 = vpack.c.b16 %v1293, %v1287
    %v1588 = vpack.c.b16 %v1294, %v1288
    %v1589 = vpack.c.b16 %v1295, %v1289
    %v1590 = vpack.c.b16 %v1302, %v1296
    %v1591 = vpack.c.b16 %v1303, %v1297
    %v1592 = vpack.c.b16 %v1304, %v1298
    %v1593 = vpack.c.b16 %v1305, %v1299
    %v1594 = vpack.c.b16 %v1306, %v1300
    %v1595 = vpack.c.b16 %v1307, %v1301
    %1884 = vmatprep.subr.bf16.mxu0 %v1351
    %1885 = vmatpush1.bf16.msra.mxu0 %v1350
    %1886 = vmatprep.subr.bf16.mxu0 %v1345
    %1887 = vmatpush1.bf16.msra.mxu0 %v1344
    %1888 = vmatprep.subr.bf16.mxu0 %v1339
    %1889 = vmatpush1.bf16.msra.mxu0 %v1338
    %1890 = vmatprep.subr.bf16.mxu0 %v1333
    %1891 = vmatpush1.bf16.msra.mxu0 %v1332
    %1892 = vmatprep.subr.bf16.mxu0 %v1327
    %1893 = vmatpush1.bf16.msra.mxu0 %v1326
    %1894 = vmatprep.subr.bf16.mxu0 %v1321
    %1895 = vmatpush1.bf16.msra.mxu0 %v1320
    %1896 = vmatprep.subr.bf16.mxu0 %v1315
    %1897 = vmatpush1.bf16.msra.mxu0 %v1314
    %1898 = vmatprep.subr.bf16.mxu0 %v1309
    %1899 = vmatpush1.bf16.msra.mxu0 %v1308
    %1900 = vmatprep.subr.bf16.mxu0 %v1399
    %1901 = vmatpush2.bf16.msra.mxu0 %v1398
    %1902 = vmatprep.subr.bf16.mxu0 %v1393
    %1903 = vmatpush2.bf16.msra.mxu0 %v1392
    %1904 = vmatprep.subr.bf16.mxu0 %v1387
    %1905 = vmatpush2.bf16.msra.mxu0 %v1386
    %1906 = vmatprep.subr.bf16.mxu0 %v1381
    %1907 = vmatpush2.bf16.msra.mxu0 %v1380
    %1908 = vmatprep.subr.bf16.mxu0 %v1375
    %1909 = vmatpush2.bf16.msra.mxu0 %v1374
    %1910 = vmatprep.subr.bf16.mxu0 %v1369
    %1911 = vmatpush2.bf16.msra.mxu0 %v1368
    %1912 = vmatprep.subr.bf16.mxu0 %v1363
    %1913 = vmatpush2.bf16.msra.mxu0 %v1362
    %1914 = vmatprep.subr.bf16.mxu0 %v1357
    %1915 = vmatpush2.bf16.msra.mxu0 %v1356
    %1916 = vmatprep.mubr.bf16.mxu0 %v433
    %1917 = vmatmul.mubr.bf16.gmra.mxu0 %v432
    %v1918 = vpop.f32.mrf.mxu0
    %v1919 = vadd.f32 %v387, %v1918
    %v1920 = vpop.f32.mrf.mxu0
    %v1921 = vadd.f32 %v391, %v1920
    %v1922 = vpop.f32.mrf.mxu0
    %v1923 = vadd.f32 %v387, %v1922
    %v1924 = vpop.f32.mrf.mxu0
    %v1925 = vadd.f32 %v391, %v1924
    %1926 = vdwg.mxu0
    %1927 = vmatprep.subr.bf16.mxu0 %v1447
    %1928 = vmatpush1.bf16.msra.mxu0 %v1446
    %1929 = vmatprep.subr.bf16.mxu0 %v1441
    %1930 = vmatpush1.bf16.msra.mxu0 %v1440
    %1931 = vmatprep.subr.bf16.mxu0 %v1435
    %1932 = vmatpush1.bf16.msra.mxu0 %v1434
    %1933 = vmatprep.subr.bf16.mxu0 %v1429
    %1934 = vmatpush1.bf16.msra.mxu0 %v1428
    %1935 = vmatprep.subr.bf16.mxu0 %v1423
    %1936 = vmatpush1.bf16.msra.mxu0 %v1422
    %1937 = vmatprep.subr.bf16.mxu0 %v1417
    %1938 = vmatpush1.bf16.msra.mxu0 %v1416
    %1939 = vmatprep.subr.bf16.mxu0 %v1411
    %1940 = vmatpush1.bf16.msra.mxu0 %v1410
    %1941 = vmatprep.subr.bf16.mxu0 %v1405
    %1942 = vmatpush1.bf16.msra.mxu0 %v1404
    %1943 = vmatprep.subr.bf16.mxu0 %v1495
    %1944 = vmatpush2.bf16.msra.mxu0 %v1494
    %1945 = vmatprep.subr.bf16.mxu0 %v1489
    %1946 = vmatpush2.bf16.msra.mxu0 %v1488
    %1947 = vmatprep.subr.bf16.mxu0 %v1483
    %1948 = vmatpush2.bf16.msra.mxu0 %v1482
    %1949 = vmatprep.subr.bf16.mxu0 %v1477
    %1950 = vmatpush2.bf16.msra.mxu0 %v1476
    %1951 = vmatprep.subr.bf16.mxu0 %v1471
    %1952 = vmatpush2.bf16.msra.mxu0 %v1470
    %1953 = vmatprep.subr.bf16.mxu0 %v1465
    %1954 = vmatpush2.bf16.msra.mxu0 %v1464
    %1955 = vmatprep.subr.bf16.mxu0 %v1459
    %1956 = vmatpush2.bf16.msra.mxu0 %v1458
    %1957 = vmatprep.subr.bf16.mxu0 %v1453
    %1958 = vmatpush2.bf16.msra.mxu0 %v1452
    %1959 = vmatprep.mubr.bf16.mxu0 %v435
    %1960 = vmatmul.mubr.bf16.gmra.mxu0 %v434
    %v1961 = vpop.f32.mrf.mxu0
    %v1962 = vadd.f32 %v1919, %v1961
    %v1963 = vpop.f32.mrf.mxu0
    %v1964 = vadd.f32 %v1921, %v1963
    %v1965 = vpop.f32.mrf.mxu0
    %v1966 = vadd.f32 %v1923, %v1965
    %v1967 = vpop.f32.mrf.mxu0
    %v1968 = vadd.f32 %v1925, %v1967
    %1969 = vdwg.mxu0
    %1970 = vmatprep.subr.bf16.mxu0 %v1543
    %1971 = vmatpush1.bf16.msra.mxu0 %v1542
    %1972 = vmatprep.subr.bf16.mxu0 %v1537
    %1973 = vmatpush1.bf16.msra.mxu0 %v1536
    %1974 = vmatprep.subr.bf16.mxu0 %v1531
    %1975 = vmatpush1.bf16.msra.mxu0 %v1530
    %1976 = vmatprep.subr.bf16.mxu0 %v1525
    %1977 = vmatpush1.bf16.msra.mxu0 %v1524
    %1978 = vmatprep.subr.bf16.mxu0 %v1519
    %1979 = vmatpush1.bf16.msra.mxu0 %v1518
    %1980 = vmatprep.subr.bf16.mxu0 %v1513
    %1981 = vmatpush1.bf16.msra.mxu0 %v1512
    %1982 = vmatprep.subr.bf16.mxu0 %v1507
    %1983 = vmatpush1.bf16.msra.mxu0 %v1506
    %1984 = vmatprep.subr.bf16.mxu0 %v1501
    %1985 = vmatpush1.bf16.msra.mxu0 %v1500
    %1986 = vmatprep.subr.bf16.mxu0 %v1591
    %1987 = vmatpush2.bf16.msra.mxu0 %v1590
    %1988 = vmatprep.subr.bf16.mxu0 %v1585
    %1989 = vmatpush2.bf16.msra.mxu0 %v1584
    %1990 = vmatprep.subr.bf16.mxu0 %v1579
    %1991 = vmatpush2.bf16.msra.mxu0 %v1578
    %1992 = vmatprep.subr.bf16.mxu0 %v1573
    %1993 = vmatpush2.bf16.msra.mxu0 %v1572
    %1994 = vmatprep.subr.bf16.mxu0 %v1567
    %1995 = vmatpush2.bf16.msra.mxu0 %v1566
    %1996 = vmatprep.subr.bf16.mxu0 %v1561
    %1997 = vmatpush2.bf16.msra.mxu0 %v1560
    %1998 = vmatprep.subr.bf16.mxu0 %v1555
    %1999 = vmatpush2.bf16.msra.mxu0 %v1554
    %2000 = vmatprep.subr.bf16.mxu0 %v1549
    %2001 = vmatpush2.bf16.msra.mxu0 %v1548
    %2002 = vmatprep.mubr.bf16.mxu0 %v437
    %2003 = vmatmul.mubr.bf16.gmra.mxu0 %v436
    %v2004 = vpop.f32.mrf.mxu0
    %v2005 = vadd.f32 %v1962, %v2004
    %v2006 = vpop.f32.mrf.mxu0
    %v2007 = vadd.f32 %v1964, %v2006
    %v2008 = vpop.f32.mrf.mxu0
    %v2009 = vadd.f32 %v1966, %v2008
    %v2010 = vpop.f32.mrf.mxu0
    %v2011 = vadd.f32 %v1968, %v2010
    %2012 = vdwg.mxu0
    %2013 = vmatprep.subr.bf16.mxu0 %v1353
    %2014 = vmatpush1.bf16.msra.mxu0 %v1352
    %2015 = vmatprep.subr.bf16.mxu0 %v1347
    %2016 = vmatpush1.bf16.msra.mxu0 %v1346
    %2017 = vmatprep.subr.bf16.mxu0 %v1341
    %2018 = vmatpush1.bf16.msra.mxu0 %v1340
    %2019 = vmatprep.subr.bf16.mxu0 %v1335
    %2020 = vmatpush1.bf16.msra.mxu0 %v1334
    %2021 = vmatprep.subr.bf16.mxu0 %v1329
    %2022 = vmatpush1.bf16.msra.mxu0 %v1328
    %2023 = vmatprep.subr.bf16.mxu0 %v1323
    %2024 = vmatpush1.bf16.msra.mxu0 %v1322
    %2025 = vmatprep.subr.bf16.mxu0 %v1317
    %2026 = vmatpush1.bf16.msra.mxu0 %v1316
    %2027 = vmatprep.subr.bf16.mxu0 %v1311
    %2028 = vmatpush1.bf16.msra.mxu0 %v1310
    %2029 = vmatprep.subr.bf16.mxu0 %v1401
    %2030 = vmatpush2.bf16.msra.mxu0 %v1400
    %2031 = vmatprep.subr.bf16.mxu0 %v1395
    %2032 = vmatpush2.bf16.msra.mxu0 %v1394
    %2033 = vmatprep.subr.bf16.mxu0 %v1389
    %2034 = vmatpush2.bf16.msra.mxu0 %v1388
    %2035 = vmatprep.subr.bf16.mxu0 %v1383
    %2036 = vmatpush2.bf16.msra.mxu0 %v1382
    %2037 = vmatprep.subr.bf16.mxu0 %v1377
    %2038 = vmatpush2.bf16.msra.mxu0 %v1376
    %2039 = vmatprep.subr.bf16.mxu0 %v1371
    %2040 = vmatpush2.bf16.msra.mxu0 %v1370
    %2041 = vmatprep.subr.bf16.mxu0 %v1365
    %2042 = vmatpush2.bf16.msra.mxu0 %v1364
    %2043 = vmatprep.subr.bf16.mxu0 %v1359
    %2044 = vmatpush2.bf16.msra.mxu0 %v1358
    %2045 = vmatprep.mubr.bf16.mxu0 %v433
    %2046 = vmatmul.mubr.bf16.gmra.mxu0 %v432
    %v2047 = vpop.f32.mrf.mxu0
    %v2048 = vadd.f32 %v395, %v2047
    %v2049 = vpop.f32.mrf.mxu0
    %v2050 = vadd.f32 %v399, %v2049
    %v2051 = vpop.f32.mrf.mxu0
    %v2052 = vadd.f32 %v395, %v2051
    %v2053 = vpop.f32.mrf.mxu0
    %v2054 = vadd.f32 %v399, %v2053
    %2055 = vdwg.mxu0
    %2056 = vmatprep.subr.bf16.mxu0 %v1449
    %2057 = vmatpush1.bf16.msra.mxu0 %v1448
    %2058 = vmatprep.subr.bf16.mxu0 %v1443
    %2059 = vmatpush1.bf16.msra.mxu0 %v1442
    %2060 = vmatprep.subr.bf16.mxu0 %v1437
    %2061 = vmatpush1.bf16.msra.mxu0 %v1436
    %2062 = vmatprep.subr.bf16.mxu0 %v1431
    %2063 = vmatpush1.bf16.msra.mxu0 %v1430
    %2064 = vmatprep.subr.bf16.mxu0 %v1425
    %2065 = vmatpush1.bf16.msra.mxu0 %v1424
    %2066 = vmatprep.subr.bf16.mxu0 %v1419
    %2067 = vmatpush1.bf16.msra.mxu0 %v1418
    %2068 = vmatprep.subr.bf16.mxu0 %v1413
    %2069 = vmatpush1.bf16.msra.mxu0 %v1412
    %2070 = vmatprep.subr.bf16.mxu0 %v1407
    %2071 = vmatpush1.bf16.msra.mxu0 %v1406
    %2072 = vmatprep.subr.bf16.mxu0 %v1497
    %2073 = vmatpush2.bf16.msra.mxu0 %v1496
    %2074 = vmatprep.subr.bf16.mxu0 %v1491
    %2075 = vmatpush2.bf16.msra.mxu0 %v1490
    %2076 = vmatprep.subr.bf16.mxu0 %v1485
    %2077 = vmatpush2.bf16.msra.mxu0 %v1484
    %2078 = vmatprep.subr.bf16.mxu0 %v1479
    %2079 = vmatpush2.bf16.msra.mxu0 %v1478
    %2080 = vmatprep.subr.bf16.mxu0 %v1473
    %2081 = vmatpush2.bf16.msra.mxu0 %v1472
    %2082 = vmatprep.subr.bf16.mxu0 %v1467
    %2083 = vmatpush2.bf16.msra.mxu0 %v1466
    %2084 = vmatprep.subr.bf16.mxu0 %v1461
    %2085 = vmatpush2.bf16.msra.mxu0 %v1460
    %2086 = vmatprep.subr.bf16.mxu0 %v1455
    %2087 = vmatpush2.bf16.msra.mxu0 %v1454
    %2088 = vmatprep.mubr.bf16.mxu0 %v435
    %2089 = vmatmul.mubr.bf16.gmra.mxu0 %v434
    %v2090 = vpop.f32.mrf.mxu0
    %v2091 = vadd.f32 %v2048, %v2090
    %v2092 = vpop.f32.mrf.mxu0
    %v2093 = vadd.f32 %v2050, %v2092
    %v2094 = vpop.f32.mrf.mxu0
    %v2095 = vadd.f32 %v2052, %v2094
    %v2096 = vpop.f32.mrf.mxu0
    %v2097 = vadd.f32 %v2054, %v2096
    %2098 = vdwg.mxu0
    %2099 = vmatprep.subr.bf16.mxu0 %v1545
    %2100 = vmatpush1.bf16.msra.mxu0 %v1544
    %2101 = vmatprep.subr.bf16.mxu0 %v1539
    %2102 = vmatpush1.bf16.msra.mxu0 %v1538
    %2103 = vmatprep.subr.bf16.mxu0 %v1533
    %2104 = vmatpush1.bf16.msra.mxu0 %v1532
    %2105 = vmatprep.subr.bf16.mxu0 %v1527
    %2106 = vmatpush1.bf16.msra.mxu0 %v1526
    %2107 = vmatprep.subr.bf16.mxu0 %v1521
    %2108 = vmatpush1.bf16.msra.mxu0 %v1520
    %2109 = vmatprep.subr.bf16.mxu0 %v1515
    %2110 = vmatpush1.bf16.msra.mxu0 %v1514
    %2111 = vmatprep.subr.bf16.mxu0 %v1509
    %2112 = vmatpush1.bf16.msra.mxu0 %v1508
    %2113 = vmatprep.subr.bf16.mxu0 %v1503
    %2114 = vmatpush1.bf16.msra.mxu0 %v1502
    %2115 = vmatprep.subr.bf16.mxu0 %v1593
    %2116 = vmatpush2.bf16.msra.mxu0 %v1592
    %2117 = vmatprep.subr.bf16.mxu0 %v1587
    %2118 = vmatpush2.bf16.msra.mxu0 %v1586
    %2119 = vmatprep.subr.bf16.mxu0 %v1581
    %2120 = vmatpush2.bf16.msra.mxu0 %v1580
    %2121 = vmatprep.subr.bf16.mxu0 %v1575
    %2122 = vmatpush2.bf16.msra.mxu0 %v1574
    %2123 = vmatprep.subr.bf16.mxu0 %v1569
    %2124 = vmatpush2.bf16.msra.mxu0 %v1568
    %2125 = vmatprep.subr.bf16.mxu0 %v1563
    %2126 = vmatpush2.bf16.msra.mxu0 %v1562
    %2127 = vmatprep.subr.bf16.mxu0 %v1557
    %2128 = vmatpush2.bf16.msra.mxu0 %v1556
    %2129 = vmatprep.subr.bf16.mxu0 %v1551
    %2130 = vmatpush2.bf16.msra.mxu0 %v1550
    %2131 = vmatprep.mubr.bf16.mxu0 %v437
    %2132 = vmatmul.mubr.bf16.gmra.mxu0 %v436
    %v2133 = vpop.f32.mrf.mxu0
    %v2134 = vadd.f32 %v2091, %v2133
    %v2135 = vpop.f32.mrf.mxu0
    %v2136 = vadd.f32 %v2093, %v2135
    %v2137 = vpop.f32.mrf.mxu0
    %v2138 = vadd.f32 %v2095, %v2137
    %v2139 = vpop.f32.mrf.mxu0
    %v2140 = vadd.f32 %v2097, %v2139
    %2141 = vdwg.mxu0
    %2142 = vmatprep.subr.bf16.mxu0 %v1355
    %2143 = vmatpush1.bf16.msra.mxu0 %v1354
    %2144 = vmatprep.subr.bf16.mxu0 %v1349
    %2145 = vmatpush1.bf16.msra.mxu0 %v1348
    %2146 = vmatprep.subr.bf16.mxu0 %v1343
    %2147 = vmatpush1.bf16.msra.mxu0 %v1342
    %2148 = vmatprep.subr.bf16.mxu0 %v1337
    %2149 = vmatpush1.bf16.msra.mxu0 %v1336
    %2150 = vmatprep.subr.bf16.mxu0 %v1331
    %2151 = vmatpush1.bf16.msra.mxu0 %v1330
    %2152 = vmatprep.subr.bf16.mxu0 %v1325
    %2153 = vmatpush1.bf16.msra.mxu0 %v1324
    %2154 = vmatprep.subr.bf16.mxu0 %v1319
    %2155 = vmatpush1.bf16.msra.mxu0 %v1318
    %2156 = vmatprep.subr.bf16.mxu0 %v1313
    %2157 = vmatpush1.bf16.msra.mxu0 %v1312
    %2158 = vmatprep.subr.bf16.mxu0 %v1403
    %2159 = vmatpush2.bf16.msra.mxu0 %v1402
    %2160 = vmatprep.subr.bf16.mxu0 %v1397
    %2161 = vmatpush2.bf16.msra.mxu0 %v1396
    %2162 = vmatprep.subr.bf16.mxu0 %v1391
    %2163 = vmatpush2.bf16.msra.mxu0 %v1390
    %2164 = vmatprep.subr.bf16.mxu0 %v1385
    %2165 = vmatpush2.bf16.msra.mxu0 %v1384
    %2166 = vmatprep.subr.bf16.mxu0 %v1379
    %2167 = vmatpush2.bf16.msra.mxu0 %v1378
    %2168 = vmatprep.subr.bf16.mxu0 %v1373
    %2169 = vmatpush2.bf16.msra.mxu0 %v1372
    %2170 = vmatprep.subr.bf16.mxu0 %v1367
    %2171 = vmatpush2.bf16.msra.mxu0 %v1366
    %2172 = vmatprep.subr.bf16.mxu0 %v1361
    %2173 = vmatpush2.bf16.msra.mxu0 %v1360
    %2174 = vmatprep.mubr.bf16.mxu0 %v433
    %2175 = vmatmul.mubr.bf16.gmra.mxu0 %v432
    %v2176 = vpop.f32.mrf.mxu0
    %v2177 = vadd.f32 %v403, %v2176
    %v2178 = vpop.f32.mrf.mxu0
    %v2179 = vadd.f32 %v407, %v2178
    %v2180 = vpop.f32.mrf.mxu0
    %v2181 = vadd.f32 %v403, %v2180
    %v2182 = vpop.f32.mrf.mxu0
    %v2183 = vadd.f32 %v407, %v2182
    %2184 = vdwg.mxu0
    %2185 = vmatprep.subr.bf16.mxu0 %v1451
    %2186 = vmatpush1.bf16.msra.mxu0 %v1450
    %2187 = vmatprep.subr.bf16.mxu0 %v1445
    %2188 = vmatpush1.bf16.msra.mxu0 %v1444
    %2189 = vmatprep.subr.bf16.mxu0 %v1439
    %2190 = vmatpush1.bf16.msra.mxu0 %v1438
    %2191 = vmatprep.subr.bf16.mxu0 %v1433
    %2192 = vmatpush1.bf16.msra.mxu0 %v1432
    %2193 = vmatprep.subr.bf16.mxu0 %v1427
    %2194 = vmatpush1.bf16.msra.mxu0 %v1426
    %2195 = vmatprep.subr.bf16.mxu0 %v1421
    %2196 = vmatpush1.bf16.msra.mxu0 %v1420
    %2197 = vmatprep.subr.bf16.mxu0 %v1415
    %2198 = vmatpush1.bf16.msra.mxu0 %v1414
    %2199 = vmatprep.subr.bf16.mxu0 %v1409
    %2200 = vmatpush1.bf16.msra.mxu0 %v1408
    %2201 = vmatprep.subr.bf16.mxu0 %v1499
    %2202 = vmatpush2.bf16.msra.mxu0 %v1498
    %2203 = vmatprep.subr.bf16.mxu0 %v1493
    %2204 = vmatpush2.bf16.msra.mxu0 %v1492
    %2205 = vmatprep.subr.bf16.mxu0 %v1487
    %2206 = vmatpush2.bf16.msra.mxu0 %v1486
    %2207 = vmatprep.subr.bf16.mxu0 %v1481
    %2208 = vmatpush2.bf16.msra.mxu0 %v1480
    %2209 = vmatprep.subr.bf16.mxu0 %v1475
    %2210 = vmatpush2.bf16.msra.mxu0 %v1474
    %2211 = vmatprep.subr.bf16.mxu0 %v1469
    %2212 = vmatpush2.bf16.msra.mxu0 %v1468
    %2213 = vmatprep.subr.bf16.mxu0 %v1463
    %2214 = vmatpush2.bf16.msra.mxu0 %v1462
    %2215 = vmatprep.subr.bf16.mxu0 %v1457
    %2216 = vmatpush2.bf16.msra.mxu0 %v1456
    %2217 = vmatprep.mubr.bf16.mxu0 %v435
    %2218 = vmatmul.mubr.bf16.gmra.mxu0 %v434
    %v2219 = vpop.f32.mrf.mxu0
    %v2220 = vadd.f32 %v2177, %v2219
    %v2221 = vpop.f32.mrf.mxu0
    %v2222 = vadd.f32 %v2179, %v2221
    %v2223 = vpop.f32.mrf.mxu0
    %v2224 = vadd.f32 %v2181, %v2223
    %v2225 = vpop.f32.mrf.mxu0
    %v2226 = vadd.f32 %v2183, %v2225
    %2227 = vdwg.mxu0
    %2228 = vmatprep.subr.bf16.mxu0 %v1547
    %2229 = vmatpush1.bf16.msra.mxu0 %v1546
    %2230 = vmatprep.subr.bf16.mxu0 %v1541
    %2231 = vmatpush1.bf16.msra.mxu0 %v1540
    %2232 = vmatprep.subr.bf16.mxu0 %v1535
    %2233 = vmatpush1.bf16.msra.mxu0 %v1534
    %2234 = vmatprep.subr.bf16.mxu0 %v1529
    %2235 = vmatpush1.bf16.msra.mxu0 %v1528
    %2236 = vmatprep.subr.bf16.mxu0 %v1523
    %2237 = vmatpush1.bf16.msra.mxu0 %v1522
    %2238 = vmatprep.subr.bf16.mxu0 %v1517
    %2239 = vmatpush1.bf16.msra.mxu0 %v1516
    %2240 = vmatprep.subr.bf16.mxu0 %v1511
    %2241 = vmatpush1.bf16.msra.mxu0 %v1510
    %2242 = vmatprep.subr.bf16.mxu0 %v1505
    %2243 = vmatpush1.bf16.msra.mxu0 %v1504
    %2244 = vmatprep.subr.bf16.mxu0 %v1595
    %2245 = vmatpush2.bf16.msra.mxu0 %v1594
    %2246 = vmatprep.subr.bf16.mxu0 %v1589
    %2247 = vmatpush2.bf16.msra.mxu0 %v1588
    %2248 = vmatprep.subr.bf16.mxu0 %v1583
    %2249 = vmatpush2.bf16.msra.mxu0 %v1582
    %2250 = vmatprep.subr.bf16.mxu0 %v1577
    %2251 = vmatpush2.bf16.msra.mxu0 %v1576
    %2252 = vmatprep.subr.bf16.mxu0 %v1571
    %2253 = vmatpush2.bf16.msra.mxu0 %v1570
    %2254 = vmatprep.subr.bf16.mxu0 %v1565
    %2255 = vmatpush2.bf16.msra.mxu0 %v1564
    %2256 = vmatprep.subr.bf16.mxu0 %v1559
    %2257 = vmatpush2.bf16.msra.mxu0 %v1558
    %2258 = vmatprep.subr.bf16.mxu0 %v1553
    %2259 = vmatpush2.bf16.msra.mxu0 %v1552
    %2260 = vmatprep.mubr.bf16.mxu0 %v437
    %2261 = vmatmul.mubr.bf16.gmra.mxu0 %v436
    %v2262 = vpop.f32.mrf.mxu0
    %v2263 = vadd.f32 %v2220, %v2262
    %v2264 = vpop.f32.mrf.mxu0
    %v2265 = vadd.f32 %v2222, %v2264
    %v2266 = vpop.f32.mrf.mxu0
    %v2267 = vadd.f32 %v2224, %v2266
    %v2268 = vpop.f32.mrf.mxu0
    %v2269 = vadd.f32 %v2226, %v2268
    %2270 = vdwg.mxu0
    %v2271 = vtanh.pop %v2005
    %v2272 = vtanh.pop %v2007
    %v2273 = vtanh.pop %v2134
    %v2274 = vtanh.pop %v2136
    %v2275 = vtanh.pop %v2263
    %v2276 = vtanh.pop %v2265
    %v2277 = vtanh.pop %v2009
    %v2278 = vtanh.pop %v2011
    %v2279 = vtanh.pop %v2138
    %v2280 = vtanh.pop %v2140
    %v2281 = vtanh.pop %v2267
    %v2282 = vtanh.pop %v2269
    %v2283 = vpack.c.bf16 %v2277, %v2271
    %v2284 = vpack.c.bf16 %v2278, %v2272
    %v2285 = vpack.c.bf16 %v2279, %v2273
    %v2286 = vpack.c.bf16 %v2280, %v2274
    %v2287 = vpack.c.bf16 %v2281, %v2275
    %v2288 = vpack.c.bf16 %v2282, %v2276
    %v2289 = vld [vmem:[#allocation8] sm:$0xf]
    %v2290 = vld [vmem:[#allocation8 + $0x4] sm:$0xf]
    %v2291 = vld [vmem:[#allocation8 + $0x8] sm:$0xf]
    %v2292 = vld [vmem:[#allocation8 + $0xc] sm:$0xf]
    %v2293 = vld [vmem:[#allocation8 + $0x10] sm:$0xf]
    %v2294 = vld [vmem:[#allocation8 + $0x14] sm:$0xf]
    %v2295 = vld [vmem:[#allocation8 + $0x18] sm:$0xf]
    %v2296 = vld [vmem:[#allocation8 + $0x1c] sm:$0xf]
    %v2297 = vld [vmem:[#allocation8 + $0x20] sm:$0xf]
    %v2298 = vld [vmem:[#allocation8 + $0x24] sm:$0xf]
    %v2299 = vld [vmem:[#allocation8 + $0x28] sm:$0xf]
    %v2300 = vld [vmem:[#allocation8 + $0x2c] sm:$0xf]
    %v2301 = vld [vmem:[#allocation8 + $0x30] sm:$0xf]
    %v2302 = vld [vmem:[#allocation8 + $0x34] sm:$0xf]
    %v2303 = vld [vmem:[#allocation8 + $0x38] sm:$0xf]
    %v2304 = vld [vmem:[#allocation8 + $0x3c] sm:$0xf]
    %v2305 = vld [vmem:[#allocation8 + $0x40] sm:$0xf]
    %v2306 = vld [vmem:[#allocation8 + $0x44] sm:$0xf]
    %v2307 = vld [vmem:[#allocation8 + $0x48] sm:$0xf]
    %v2308 = vld [vmem:[#allocation8 + $0x4c] sm:$0xf]
    %v2309 = vld [vmem:[#allocation8 + $0x50] sm:$0xf]
    %v2310 = vld [vmem:[#allocation8 + $0x54] sm:$0xf]
    %v2311 = vld [vmem:[#allocation8 + $0x58] sm:$0xf]
    %v2312 = vld [vmem:[#allocation8 + $0x5c] sm:$0xf]
    %v2313 = vld [vmem:[#allocation8 + $0x60] sm:$0xf]
    %v2314 = vld [vmem:[#allocation8 + $0x64] sm:$0xf]
    %v2315 = vld [vmem:[#allocation8 + $0x68] sm:$0xf]
    %v2316 = vld [vmem:[#allocation8 + $0x6c] sm:$0xf]
    %v2317 = vld [vmem:[#allocation8 + $0x70] sm:$0xf]
    %v2318 = vld [vmem:[#allocation8 + $0x74] sm:$0xf]
    %v2319 = vld [vmem:[#allocation8 + $0x78] sm:$0xf]
    %v2320 = vld [vmem:[#allocation8 + $0x7c] sm:$0xf]
    %v2321 = vld [vmem:[#allocation8 + $0x80] sm:$0xf]
    %v2322 = vld [vmem:[#allocation8 + $0x84] sm:$0xf]
    %v2323 = vld [vmem:[#allocation8 + $0x88] sm:$0xf]
    %v2324 = vld [vmem:[#allocation8 + $0x8c] sm:$0xf]
    %v2325 = vld [vmem:[#allocation8 + $0x90] sm:$0xf]
    %v2326 = vld [vmem:[#allocation8 + $0x94] sm:$0xf]
    %v2327 = vld [vmem:[#allocation8 + $0x98] sm:$0xf]
    %v2328 = vld [vmem:[#allocation8 + $0x9c] sm:$0xf]
    %v2329 = vld [vmem:[#allocation8 + $0xa0] sm:$0xf]
    %v2330 = vld [vmem:[#allocation8 + $0xa4] sm:$0xf]
    %v2331 = vld [vmem:[#allocation8 + $0xa8] sm:$0xf]
    %v2332 = vld [vmem:[#allocation8 + $0xac] sm:$0xf]
    %v2333 = vld [vmem:[#allocation8 + $0xb0] sm:$0xf]
    %v2334 = vld [vmem:[#allocation8 + $0xb4] sm:$0xf]
    %v2335 = vld [vmem:[#allocation8 + $0xb8] sm:$0xf]
    %v2336 = vld [vmem:[#allocation8 + $0xbc] sm:$0xf]
    %v2337 = vld [vmem:[#allocation8 + $0xc0] sm:$0xf]
    %v2338 = vld [vmem:[#allocation8 + $0xc4] sm:$0xf]
    %v2339 = vld [vmem:[#allocation8 + $0xc8] sm:$0xf]
    %v2340 = vld [vmem:[#allocation8 + $0xcc] sm:$0xf]
    %v2341 = vld [vmem:[#allocation8 + $0xd0] sm:$0xf]
    %v2342 = vld [vmem:[#allocation8 + $0xd4] sm:$0xf]
    %v2343 = vld [vmem:[#allocation8 + $0xd8] sm:$0xf]
    %v2344 = vld [vmem:[#allocation8 + $0xdc] sm:$0xf]
    %v2345 = vld [vmem:[#allocation8 + $0xe0] sm:$0xf]
    %v2346 = vld [vmem:[#allocation8 + $0xe4] sm:$0xf]
    %v2347 = vld [vmem:[#allocation8 + $0xe8] sm:$0xf]
    %v2348 = vld [vmem:[#allocation8 + $0xec] sm:$0xf]
    %v2349 = vld [vmem:[#allocation8 + $0xf0] sm:$0xf]
    %v2350 = vld [vmem:[#allocation8 + $0xf4] sm:$0xf]
    %v2351 = vld [vmem:[#allocation8 + $0xf8] sm:$0xf]
    %v2352 = vld [vmem:[#allocation8 + $0xfc] sm:$0xf]
    %v2353 = vld [vmem:[#allocation8 + $0x100] sm:$0xf]
    %v2354 = vld [vmem:[#allocation8 + $0x104] sm:$0xf]
    %v2355 = vld [vmem:[#allocation8 + $0x108] sm:$0xf]
    %v2356 = vld [vmem:[#allocation8 + $0x10c] sm:$0xf]
    %v2357 = vld [vmem:[#allocation8 + $0x110] sm:$0xf]
    %v2358 = vld [vmem:[#allocation8 + $0x114] sm:$0xf]
    %v2359 = vld [vmem:[#allocation8 + $0x118] sm:$0xf]
    %v2360 = vld [vmem:[#allocation8 + $0x11c] sm:$0xf]
    %v2361 = vld [vmem:[#allocation8 + $0x120] sm:$0xf]
    %v2362 = vld [vmem:[#allocation8 + $0x124] sm:$0xf]
    %v2363 = vld [vmem:[#allocation8 + $0x128] sm:$0xf]
    %v2364 = vld [vmem:[#allocation8 + $0x12c] sm:$0xf]
    %v2365 = vld [vmem:[#allocation8 + $0x130] sm:$0xf]
    %v2366 = vld [vmem:[#allocation8 + $0x134] sm:$0xf]
    %v2367 = vld [vmem:[#allocation8 + $0x138] sm:$0xf]
    %v2368 = vld [vmem:[#allocation8 + $0x13c] sm:$0xf]
    %v2369 = vld [vmem:[#allocation8 + $0x140] sm:$0xf]
    %v2370 = vld [vmem:[#allocation8 + $0x144] sm:$0xf]
    %v2371 = vld [vmem:[#allocation8 + $0x148] sm:$0xf]
    %v2372 = vld [vmem:[#allocation8 + $0x14c] sm:$0xf]
    %v2373 = vld [vmem:[#allocation8 + $0x150] sm:$0xf]
    %v2374 = vld [vmem:[#allocation8 + $0x154] sm:$0xf]
    %v2375 = vld [vmem:[#allocation8 + $0x158] sm:$0xf]
    %v2376 = vld [vmem:[#allocation8 + $0x15c] sm:$0xf]
    %v2377 = vld [vmem:[#allocation8 + $0x160] sm:$0xf]
    %v2378 = vld [vmem:[#allocation8 + $0x164] sm:$0xf]
    %v2379 = vld [vmem:[#allocation8 + $0x168] sm:$0xf]
    %v2380 = vld [vmem:[#allocation8 + $0x16c] sm:$0xf]
    %v2381 = vld [vmem:[#allocation8 + $0x170] sm:$0xf]
    %v2382 = vld [vmem:[#allocation8 + $0x174] sm:$0xf]
    %v2383 = vld [vmem:[#allocation8 + $0x178] sm:$0xf]
    %v2384 = vld [vmem:[#allocation8 + $0x17c] sm:$0xf]
    %v2481 = vunpack.c.l.b16 %v2289
    %v2482 = vunpack.c.l.b16 %v2290
    %v2483 = vunpack.c.l.b16 %v2291
    %v2484 = vunpack.c.l.b16 %v2292
    %v2485 = vunpack.c.l.b16 %v2293
    %v2486 = vunpack.c.l.b16 %v2294
    %v2487 = vunpack.c.l.b16 %v2295
    %v2488 = vunpack.c.l.b16 %v2296
    %v2489 = vunpack.c.l.b16 %v2297
    %v2490 = vunpack.c.l.b16 %v2298
    %v2491 = vunpack.c.l.b16 %v2299
    %v2492 = vunpack.c.l.b16 %v2300
    %v2493 = vunpack.c.l.b16 %v2301
    %v2494 = vunpack.c.l.b16 %v2302
    %v2495 = vunpack.c.l.b16 %v2303
    %v2496 = vunpack.c.l.b16 %v2304
    %v2497 = vunpack.c.l.b16 %v2305
    %v2498 = vunpack.c.l.b16 %v2306
    %v2499 = vunpack.c.l.b16 %v2307
    %v2500 = vunpack.c.l.b16 %v2308
    %v2501 = vunpack.c.l.b16 %v2309
    %v2502 = vunpack.c.l.b16 %v2310
    %v2503 = vunpack.c.l.b16 %v2311
    %v2504 = vunpack.c.l.b16 %v2312
    %v2505 = vunpack.c.l.b16 %v2313
    %v2506 = vunpack.c.l.b16 %v2314
    %v2507 = vunpack.c.l.b16 %v2315
    %v2508 = vunpack.c.l.b16 %v2316
    %v2509 = vunpack.c.l.b16 %v2317
    %v2510 = vunpack.c.l.b16 %v2318
    %v2511 = vunpack.c.l.b16 %v2319
    %v2512 = vunpack.c.l.b16 %v2320
    %v2513 = vunpack.c.l.b16 %v2321
    %v2514 = vunpack.c.l.b16 %v2322
    %v2515 = vunpack.c.l.b16 %v2323
    %v2516 = vunpack.c.l.b16 %v2324
    %v2517 = vunpack.c.l.b16 %v2325
    %v2518 = vunpack.c.l.b16 %v2326
    %v2519 = vunpack.c.l.b16 %v2327
    %v2520 = vunpack.c.l.b16 %v2328
    %v2521 = vunpack.c.l.b16 %v2329
    %v2522 = vunpack.c.l.b16 %v2330
    %v2523 = vunpack.c.l.b16 %v2331
    %v2524 = vunpack.c.l.b16 %v2332
    %v2525 = vunpack.c.l.b16 %v2333
    %v2526 = vunpack.c.l.b16 %v2334
    %v2527 = vunpack.c.l.b16 %v2335
    %v2528 = vunpack.c.l.b16 %v2336
    %v2529 = vunpack.c.l.b16 %v2337
    %v2530 = vunpack.c.l.b16 %v2338
    %v2531 = vunpack.c.l.b16 %v2339
    %v2532 = vunpack.c.l.b16 %v2340
    %v2533 = vunpack.c.l.b16 %v2341
    %v2534 = vunpack.c.l.b16 %v2342
    %v2535 = vunpack.c.l.b16 %v2343
    %v2536 = vunpack.c.l.b16 %v2344
    %v2537 = vunpack.c.l.b16 %v2345
    %v2538 = vunpack.c.l.b16 %v2346
    %v2539 = vunpack.c.l.b16 %v2347
    %v2540 = vunpack.c.l.b16 %v2348
    %v2541 = vunpack.c.l.b16 %v2349
    %v2542 = vunpack.c.l.b16 %v2350
    %v2543 = vunpack.c.l.b16 %v2351
    %v2544 = vunpack.c.l.b16 %v2352
    %v2545 = vunpack.c.l.b16 %v2353
    %v2546 = vunpack.c.l.b16 %v2354
    %v2547 = vunpack.c.l.b16 %v2355
    %v2548 = vunpack.c.l.b16 %v2356
    %v2549 = vunpack.c.l.b16 %v2357
    %v2550 = vunpack.c.l.b16 %v2358
    %v2551 = vunpack.c.l.b16 %v2359
    %v2552 = vunpack.c.l.b16 %v2360
    %v2553 = vunpack.c.l.b16 %v2361
    %v2554 = vunpack.c.l.b16 %v2362
    %v2555 = vunpack.c.l.b16 %v2363
    %v2556 = vunpack.c.l.b16 %v2364
    %v2557 = vunpack.c.l.b16 %v2365
    %v2558 = vunpack.c.l.b16 %v2366
    %v2559 = vunpack.c.l.b16 %v2367
    %v2560 = vunpack.c.l.b16 %v2368
    %v2561 = vunpack.c.l.b16 %v2369
    %v2562 = vunpack.c.l.b16 %v2370
    %v2563 = vunpack.c.l.b16 %v2371
    %v2564 = vunpack.c.l.b16 %v2372
    %v2565 = vunpack.c.l.b16 %v2373
    %v2566 = vunpack.c.l.b16 %v2374
    %v2567 = vunpack.c.l.b16 %v2375
    %v2568 = vunpack.c.l.b16 %v2376
    %v2569 = vunpack.c.l.b16 %v2377
    %v2570 = vunpack.c.l.b16 %v2378
    %v2571 = vunpack.c.l.b16 %v2379
    %v2572 = vunpack.c.l.b16 %v2380
    %v2573 = vunpack.c.l.b16 %v2381
    %v2574 = vunpack.c.l.b16 %v2382
    %v2575 = vunpack.c.l.b16 %v2383
    %v2576 = vunpack.c.l.b16 %v2384
    %v2577 = vpack.c.b16 %v2482, %v2481
    %v2578 = vpack.c.b16 %v2484, %v2483
    %v2579 = vpack.c.b16 %v2486, %v2485
    %v2580 = vpack.c.b16 %v2488, %v2487
    %v2581 = vpack.c.b16 %v2490, %v2489
    %v2582 = vpack.c.b16 %v2492, %v2491
    %v2583 = vpack.c.b16 %v2494, %v2493
    %v2584 = vpack.c.b16 %v2496, %v2495
    %v2585 = vpack.c.b16 %v2498, %v2497
    %v2586 = vpack.c.b16 %v2500, %v2499
    %v2587 = vpack.c.b16 %v2502, %v2501
    %v2588 = vpack.c.b16 %v2504, %v2503
    %v2589 = vpack.c.b16 %v2506, %v2505
    %v2590 = vpack.c.b16 %v2508, %v2507
    %v2591 = vpack.c.b16 %v2510, %v2509
    %v2592 = vpack.c.b16 %v2512, %v2511
    %v2593 = vpack.c.b16 %v2514, %v2513
    %v2594 = vpack.c.b16 %v2516, %v2515
    %v2595 = vpack.c.b16 %v2518, %v2517
    %v2596 = vpack.c.b16 %v2520, %v2519
    %v2597 = vpack.c.b16 %v2522, %v2521
    %v2598 = vpack.c.b16 %v2524, %v2523
    %v2599 = vpack.c.b16 %v2526, %v2525
    %v2600 = vpack.c.b16 %v2528, %v2527
    %v2601 = vpack.c.b16 %v2530, %v2529
    %v2602 = vpack.c.b16 %v2532, %v2531
    %v2603 = vpack.c.b16 %v2534, %v2533
    %v2604 = vpack.c.b16 %v2536, %v2535
    %v2605 = vpack.c.b16 %v2538, %v2537
    %v2606 = vpack.c.b16 %v2540, %v2539
    %v2607 = vpack.c.b16 %v2542, %v2541
    %v2608 = vpack.c.b16 %v2544, %v2543
    %v2609 = vpack.c.b16 %v2546, %v2545
    %v2610 = vpack.c.b16 %v2548, %v2547
    %v2611 = vpack.c.b16 %v2550, %v2549
    %v2612 = vpack.c.b16 %v2552, %v2551
    %v2613 = vpack.c.b16 %v2554, %v2553
    %v2614 = vpack.c.b16 %v2556, %v2555
    %v2615 = vpack.c.b16 %v2558, %v2557
    %v2616 = vpack.c.b16 %v2560, %v2559
    %v2617 = vpack.c.b16 %v2562, %v2561
    %v2618 = vpack.c.b16 %v2564, %v2563
    %v2619 = vpack.c.b16 %v2566, %v2565
    %v2620 = vpack.c.b16 %v2568, %v2567
    %v2621 = vpack.c.b16 %v2570, %v2569
    %v2622 = vpack.c.b16 %v2572, %v2571
    %v2623 = vpack.c.b16 %v2574, %v2573
    %v2624 = vpack.c.b16 %v2576, %v2575
    %2673 = vmatprep.subr.bf16.mxu0 0
    %2674 = vmatpush1.bf16.msra.mxu0 %v2584
    %2675 = vmatprep.subr.bf16.mxu0 0
    %2676 = vmatpush1.bf16.msra.mxu0 %v2583
    %2677 = vmatprep.subr.bf16.mxu0 0
    %2678 = vmatpush1.bf16.msra.mxu0 %v2582
    %2679 = vmatprep.subr.bf16.mxu0 0
    %2680 = vmatpush1.bf16.msra.mxu0 %v2581
    %2681 = vmatprep.subr.bf16.mxu0 0
    %2682 = vmatpush1.bf16.msra.mxu0 %v2580
    %2683 = vmatprep.subr.bf16.mxu0 0
    %2684 = vmatpush1.bf16.msra.mxu0 %v2579
    %2685 = vmatprep.subr.bf16.mxu0 0
    %2686 = vmatpush1.bf16.msra.mxu0 %v2578
    %2687 = vmatprep.subr.bf16.mxu0 0
    %2688 = vmatpush1.bf16.msra.mxu0 %v2577
    %2689 = vmatprep.subr.bf16.mxu0 0
    %2690 = vmatpush2.bf16.msra.mxu0 %v2592
    %2691 = vmatprep.subr.bf16.mxu0 0
    %2692 = vmatpush2.bf16.msra.mxu0 %v2591
    %2693 = vmatprep.subr.bf16.mxu0 0
    %2694 = vmatpush2.bf16.msra.mxu0 %v2590
    %2695 = vmatprep.subr.bf16.mxu0 0
    %2696 = vmatpush2.bf16.msra.mxu0 %v2589
    %2697 = vmatprep.subr.bf16.mxu0 0
    %2698 = vmatpush2.bf16.msra.mxu0 %v2588
    %2699 = vmatprep.subr.bf16.mxu0 0
    %2700 = vmatpush2.bf16.msra.mxu0 %v2587
    %2701 = vmatprep.subr.bf16.mxu0 0
    %2702 = vmatpush2.bf16.msra.mxu0 %v2586
    %2703 = vmatprep.subr.bf16.mxu0 0
    %2704 = vmatpush2.bf16.msra.mxu0 %v2585
    %2705 = vmatprep.mubr.bf16.mxu0 %v2284
    %2706 = vmatmul.mubr.bf16.gmra.mxu0 %v2283
    %v2707 = vpop.f32.mrf.mxu0
    %v2708 = vadd.f32 0.0, %v2707
    %v2709 = vpop.f32.mrf.mxu0
    %v2710 = vpop.f32.mrf.mxu0
    %v2711 = vadd.f32 0.0, %v2710
    %v2712 = vpop.f32.mrf.mxu0
    %2713 = vdwg.mxu0
    %2714 = vmatprep.subr.bf16.mxu0 0
    %2715 = vmatpush1.bf16.msra.mxu0 %v2600
    %2716 = vmatprep.subr.bf16.mxu0 0
    %2717 = vmatpush1.bf16.msra.mxu0 %v2599
    %2718 = vmatprep.subr.bf16.mxu0 0
    %2719 = vmatpush1.bf16.msra.mxu0 %v2598
    %2720 = vmatprep.subr.bf16.mxu0 0
    %2721 = vmatpush1.bf16.msra.mxu0 %v2597
    %2722 = vmatprep.subr.bf16.mxu0 0
    %2723 = vmatpush1.bf16.msra.mxu0 %v2596
    %2724 = vmatprep.subr.bf16.mxu0 0
    %2725 = vmatpush1.bf16.msra.mxu0 %v2595
    %2726 = vmatprep.subr.bf16.mxu0 0
    %2727 = vmatpush1.bf16.msra.mxu0 %v2594
    %2728 = vmatprep.subr.bf16.mxu0 0
    %2729 = vmatpush1.bf16.msra.mxu0 %v2593
    %2730 = vmatprep.subr.bf16.mxu0 0
    %2731 = vmatpush2.bf16.msra.mxu0 %v2608
    %2732 = vmatprep.subr.bf16.mxu0 0
    %2733 = vmatpush2.bf16.msra.mxu0 %v2607
    %2734 = vmatprep.subr.bf16.mxu0 0
    %2735 = vmatpush2.bf16.msra.mxu0 %v2606
    %2736 = vmatprep.subr.bf16.mxu0 0
    %2737 = vmatpush2.bf16.msra.mxu0 %v2605
    %2738 = vmatprep.subr.bf16.mxu0 0
    %2739 = vmatpush2.bf16.msra.mxu0 %v2604
    %2740 = vmatprep.subr.bf16.mxu0 0
    %2741 = vmatpush2.bf16.msra.mxu0 %v2603
    %2742 = vmatprep.subr.bf16.mxu0 0
    %2743 = vmatpush2.bf16.msra.mxu0 %v2602
    %2744 = vmatprep.subr.bf16.mxu0 0
    %2745 = vmatpush2.bf16.msra.mxu0 %v2601
    %2746 = vmatprep.mubr.bf16.mxu0 %v2286
    %2747 = vmatmul.mubr.bf16.gmra.mxu0 %v2285
    %v2748 = vpop.f32.mrf.mxu0
    %v2749 = vadd.f32 %v2708, %v2748
    %v2750 = vpop.f32.mrf.mxu0
    %v2751 = vpop.f32.mrf.mxu0
    %v2752 = vadd.f32 %v2711, %v2751
    %v2753 = vpop.f32.mrf.mxu0
    %2754 = vdwg.mxu0
    %2755 = vmatprep.subr.bf16.mxu0 0
    %2756 = vmatpush1.bf16.msra.mxu0 %v2616
    %2757 = vmatprep.subr.bf16.mxu0 0
    %2758 = vmatpush1.bf16.msra.mxu0 %v2615
    %2759 = vmatprep.subr.bf16.mxu0 0
    %2760 = vmatpush1.bf16.msra.mxu0 %v2614
    %2761 = vmatprep.subr.bf16.mxu0 0
    %2762 = vmatpush1.bf16.msra.mxu0 %v2613
    %2763 = vmatprep.subr.bf16.mxu0 0
    %2764 = vmatpush1.bf16.msra.mxu0 %v2612
    %2765 = vmatprep.subr.bf16.mxu0 0
    %2766 = vmatpush1.bf16.msra.mxu0 %v2611
    %2767 = vmatprep.subr.bf16.mxu0 0
    %2768 = vmatpush1.bf16.msra.mxu0 %v2610
    %2769 = vmatprep.subr.bf16.mxu0 0
    %2770 = vmatpush1.bf16.msra.mxu0 %v2609
    %2771 = vmatprep.subr.bf16.mxu0 0
    %2772 = vmatpush2.bf16.msra.mxu0 %v2624
    %2773 = vmatprep.subr.bf16.mxu0 0
    %2774 = vmatpush2.bf16.msra.mxu0 %v2623
    %2775 = vmatprep.subr.bf16.mxu0 0
    %2776 = vmatpush2.bf16.msra.mxu0 %v2622
    %2777 = vmatprep.subr.bf16.mxu0 0
    %2778 = vmatpush2.bf16.msra.mxu0 %v2621
    %2779 = vmatprep.subr.bf16.mxu0 0
    %2780 = vmatpush2.bf16.msra.mxu0 %v2620
    %2781 = vmatprep.subr.bf16.mxu0 0
    %2782 = vmatpush2.bf16.msra.mxu0 %v2619
    %2783 = vmatprep.subr.bf16.mxu0 0
    %2784 = vmatpush2.bf16.msra.mxu0 %v2618
    %2785 = vmatprep.subr.bf16.mxu0 0
    %2786 = vmatpush2.bf16.msra.mxu0 %v2617
    %2787 = vmatprep.mubr.bf16.mxu0 %v2288
    %2788 = vmatmul.mubr.bf16.gmra.mxu0 %v2287
    %v2789 = vpop.f32.mrf.mxu0
    %v2790 = vadd.f32 %v2749, %v2789
    %v2791 = vpop.f32.mrf.mxu0
    %v2792 = vpop.f32.mrf.mxu0
    %v2793 = vadd.f32 %v2752, %v2792
    %v2794 = vpop.f32.mrf.mxu0
    %2795 = vdwg.mxu0
    %v2796 = vld [vmem:[#allocation10] sm:$0xf]
    %v2797 = vld [vmem:[#allocation10 + $0x4] sm:$0xf]
    %v2798 = vunpack.c.l.bf16 %v2796
    %v2799 = vunpack.c.l.bf16 %v2797
    %v2800 = vmax.f32 %v2790, 0.0
    %v2801 = vmax.f32 %v2793, 0.0
    %v2802 = vmul.f32 %v2790, %v2798
    %v2803 = vmul.f32 %v2793, %v2799
    %v2804 = vsub.f32 %v2800, %v2802
    %v2805 = vsub.f32 %v2801, %v2803
    %v2806 = vand.u32 2147483647, %v2790
    %v2807 = vand.u32 2147483647, %v2793
    %v2808 = vsub.f32 0.0, %v2806
    %v2809 = vsub.f32 0.0, %v2807
    %v2810 = vmul.f32 %v2808, 1.442695
    %v2811 = vpow.pop %v2810
    %v2812 = vmul.f32 %v2809, 1.442695
    %v2813 = vpow.pop %v2812
    %v2814 = vadd.f32 %v2811, 1.0
    %v2815 = vlog2.pop %v2814
    %v2816 = vmul.f32 %v2815, 0.6931472
    %v2817 = vmul.f32 -0.5, %v2811
    %v2818 = vadd.f32 %v2817, 1.0
    %v2819 = vmul.f32 %v2818, %v2811
    %v2820 = vand.u32 2147483647, %v2811
    %vm2821 = vcmp.lt.f32.partialorder %v2820, 0.0004427343
    %v2822 = vsel %vm2821, %v2819, %v2816
    %v2823 = vadd.f32 %v2813, 1.0
    %v2824 = vlog2.pop %v2823
    %v2825 = vmul.f32 %v2824, 0.6931472
    %v2826 = vmul.f32 -0.5, %v2813
    %v2827 = vadd.f32 %v2826, 1.0
    %v2828 = vmul.f32 %v2827, %v2813
    %v2829 = vand.u32 2147483647, %v2813
    %vm2830 = vcmp.lt.f32.partialorder %v2829, 0.0004427343
    %v2831 = vsel %vm2830, %v2828, %v2825
    %v2832 = vadd.f32 %v2804, %v2822
    %v2833 = vadd.f32 %v2805, %v2831
    %s2834 = smul.u32 0, 16
    %v2835 = vlaneseq
    %v2836 = vshrl.u32 %v2835, 7
    %v2837 = vadd.s32 %v2836, 8
    %v2838 = vstv %s2834
    %v2839 = vadd.s32 %v2838, %v2836
    %v2840 = vadd.s32 %v2838, %v2837
    %v2841 = vlaneseq
    %v2842 = vand.u32 %v2841, 127
    %vm2843 = vcmp.lt.s32.totalorder %v2839, 2
    %vm2844 = vcmp.lt.s32.totalorder %v2840, 2
    %vm2845 = vcmp.lt.s32.totalorder %v2842, 16
    %vm2846 = vmand %vm2843, %vm2845
    %vm2847 = vmand %vm2844, %vm2845
    %v2848 = vsel %vm2846, %v2832, 0.0
    %v2849 = vsel %vm2847, %v2833, 0.0
    %v2850 = vadd.f32 %v2848, %v2849
    %2851 = vst [vmem:[#allocation11] sm:$0xff] %v2850
    // Predicated region
    $region42: #{tpu_custom_call.1} parent=1 // pred_check
      _
    $region43: #{tpu_custom_call.1} parent=1 // pred_check_branch
      %2853 = sbr.rel (0) target = $region45
    $region44: #{tpu_custom_call.1} parent=1 // pred_region
      %s2855 = ssub.s32 128, 128
      %2856 = vsyncadd [#allocation4], %s2855
      %s2858 = sshll.u32 [#allocation11], 4
      %s2859 = int_to_ptr.vmem [resolvable:$true] %s2858
      %2861 = dma.vmem_to_hbm [thread:$0]  %s2859, 128, %s5, [#allocation4]
    $region45: #{tpu_custom_call.1} parent=1 // pred_fallthru
      _
    // Predicated region
    $region46: #{tpu_custom_call.1} parent=1 // pred_check
      _
    $region47: #{tpu_custom_call.1} parent=1 // pred_check_branch
      %2863 = sbr.rel (0) target = $region49
    $region48: #{tpu_custom_call.1} parent=1 // pred_region
      %2864 = dma.done [#allocation4], 128
    $region49: #{tpu_custom_call.1} parent=1 // pred_fallthru
      _
    %2865 = vsyncpa [#allocation3], 1
    %2866 = vsyncpa [#allocation6], 1
    %2867 = vsyncpa [#allocation9], 1
    %2868 = vsyncpa [#allocation4], 1

</llo_original>
